<compile_context>
chip_gen: v7x
topology: tpu7x:2x2x1
jax: 0.10.0
libtpu: 0.0.40
codegen_flags: <defaults>
</compile_context>

<pallas_src>
import functools

import jax
import jax.numpy as jnp
from jax import lax
from jax.experimental import pallas as pl
from jax.experimental.pallas import tpu as pltpu


# ----------------------------- fused Pallas kernel ----------------------------

def bottleneck_kernel(alpha_ref, x_ref, w1_ref, s1_ref, b1_ref,
                      w2_ref, s2_ref, b2_ref, w3_ref, mask_ref, o_ref,
                      *, H, W):
    """One batch image per grid step, channels-on-sublanes / spatial-on-lanes layout.

    x_ref  : (Cin, H*W)      input image (also the residual)
    w1_ref : (hid, Cin)      1x1 conv
    w2_ref : (9, hid, hid)   3x3 conv, tap t = 3*dh + dw, offsets (dh-1, dw-1)
    w3_ref : (Cout, hid)     1x1 conv
    s*/b*  : (hid, 1)        fused inference-BN scale / bias
    mask_ref: (9, 1, H*W)    0/1 masks zeroing out-of-image taps (zero padding)
    o_ref  : (Cout, H*W)
    """
    HW = H * W
    x = x_ref[...]                                                      # (Cin, HW)

    # --- stage 1: 1x1 conv + BN + ReLU ---------------------------------------
    y1 = jnp.dot(w1_ref[...], x, preferred_element_type=jnp.float32)    # (hid, HW)
    y1 = jnp.maximum(y1 * s1_ref[...] + b1_ref[...], 0.0)

    # --- stage 2: 3x3 conv (stride 1, pad 1) as 9 shifted matmuls + BN + ReLU -
    # center tap (dh, dw) = (1, 1): no shift, no mask
    acc2 = jnp.dot(w2_ref[4], y1, preferred_element_type=jnp.float32)   # (hid, HW)
    for t in (0, 1, 2, 3, 5, 6, 7, 8):
        oh = t // 3 - 1
        ow = t % 3 - 1
        off = oh * W + ow                         # flat spatial offset of the source pixel
        # want shifted[:, g] = y1[:, g + off]; jnp.roll semantics: out[i] = in[i - shift]
        shifted = pltpu.roll(y1, (-off) % HW, 1)
        shifted = shifted * mask_ref[t]           # zero contributions from outside the image
        acc2 = acc2 + jnp.dot(w2_ref[t], shifted, preferred_element_type=jnp.float32)
    y2 = jnp.maximum(acc2 * s2_ref[...] + b2_ref[...], 0.0)

    # --- stage 3: 1x1 conv (Dropout = identity in inference) + residual + PReLU
    # TODO(synk): training-mode Dropout RNG masking / batch-stat BN not implemented.
    y3 = jnp.dot(w3_ref[...], y2, preferred_element_type=jnp.float32)   # (Cout, HW)
    t_sum = x + y3
    alpha = alpha_ref[0]
    o_ref[...] = jnp.where(t_sum >= 0.0, t_sum, alpha * t_sum).astype(o_ref.dtype)


# ----------------------------- JAX glue / wrapper ------------------------------

def bn_fuse(gamma, beta, mean, var, eps=1e-5):
    scale = gamma / jnp.sqrt(var + eps)
    bias = beta - mean * scale
    return scale.reshape(-1, 1), bias.reshape(-1, 1)


def _tap_masks(H, W):
    """(9, 1, H*W) float masks: 1 where the 3x3 tap's source pixel is inside the image."""
    g = jnp.arange(H * W, dtype=jnp.int32)
    r = g // W
    c = g % W
    masks = []
    for t in range(9):
        oh = t // 3 - 1
        ow = t % 3 - 1
        valid = (r + oh >= 0) & (r + oh < H) & (c + ow >= 0) & (c + ow < W)
        masks.append(valid.astype(jnp.float32))
    return jnp.stack(masks).reshape(9, 1, H * W)


def bottleneck_regular(x_nchw, params):
    N, Cin, H, W = x_nchw.shape
    HW = H * W
    hid = params["w1t"].shape[0]
    Cout = params["w3t"].shape[0]
    assert Cin == Cout, "'regular' bottleneck residual add requires Cin == Cout"

    x3 = x_nchw.reshape(N, Cin, HW)          # free reshape; channels stay on sublanes
    s1, b1 = bn_fuse(*params["bn1"])
    s2, b2 = bn_fuse(*params["bn2"])
    masks = _tap_masks(H, W)

    # TODO(synk): per-image spatial block assumes Cin*H*W*4B fits VMEM; very large images
    # would need row-tiling with a 1-row halo for the 3x3 taps.
    out3 = pl.pallas_call(
        functools.partial(bottleneck_kernel, H=H, W=W),
        out_shape=jax.ShapeDtypeStruct((N, Cout, HW), jnp.float32),
        grid=(N,),
        in_specs=[
            pl.BlockSpec(memory_space=pltpu.MemorySpace.SMEM),       # alpha (1,)
            pl.BlockSpec((None, Cin, HW), lambda n: (n, 0, 0)),      # x (stage-1 input + residual)
            pl.BlockSpec((hid, Cin), lambda n: (0, 0)),              # w1^T
            pl.BlockSpec((hid, 1), lambda n: (0, 0)),                # bn1 scale
            pl.BlockSpec((hid, 1), lambda n: (0, 0)),                # bn1 bias
            pl.BlockSpec((9, hid, hid), lambda n: (0, 0, 0)),        # 3x3 tap weights
            pl.BlockSpec((hid, 1), lambda n: (0, 0)),                # bn2 scale
            pl.BlockSpec((hid, 1), lambda n: (0, 0)),                # bn2 bias
            pl.BlockSpec((Cout, hid), lambda n: (0, 0)),             # w3^T
            pl.BlockSpec((9, 1, HW), lambda n: (0, 0, 0)),           # boundary masks
        ],
        out_specs=pl.BlockSpec((None, Cout, HW), lambda n: (n, 0, 0)),
        compiler_params=pltpu.CompilerParams(dimension_semantics=("parallel",)),
    )(params["alpha"], x3, params["w1t"], s1, b1,
      params["w2taps"], s2, b2, params["w3t"], masks)

    return out3.reshape(N, Cout, H, W)


# ----------------------------- pure-JAX reference -----------------------------

def bottleneck_reference(x_nchw, params, eps=1e-5):
    x = jnp.transpose(x_nchw, (0, 2, 3, 1)).astype(jnp.float32)   # NHWC

    def bn(y, gamma, beta, mean, var):
        return (y - mean) / jnp.sqrt(var + eps) * gamma + beta

    y = jnp.einsum("nhwc,dc->nhwd", x, params["w1t"])
    y = jax.nn.relu(bn(y, *params["bn1"]))

    w2_hwio = jnp.transpose(params["w2_raw"], (2, 3, 1, 0))       # (kh, kw, cin, cout)
    y = lax.conv_general_dilated(y, w2_hwio, window_strides=(1, 1), padding="SAME",
                                 dimension_numbers=("NHWC", "HWIO", "NHWC"))
    y = jax.nn.relu(bn(y, *params["bn2"]))

    y = jnp.einsum("nhwc,dc->nhwd", y, params["w3t"])
    t = x + y
    out = jnp.where(t >= 0.0, t, params["alpha"][0] * t)
    return jnp.transpose(out, (0, 3, 1, 2))


# ----------------------------- main -------------------------------------------

if __name__ == "__main__":
    N, Cin, H, W = 2, 16, 16, 16
    Cout = Cin                      # 'regular' path residual add requires equal channels
    hid = int(Cin * 0.25)           # shrink_ratio = 0.25 -> 4

    key = jax.random.PRNGKey(0)
    k1, k2, k3, kx = jax.random.split(key, 4)

    # PyTorch conv weights: conv1x1 (hid, Cin, 1, 1), conv3x3 (hid, hid, 3, 3), conv1x1 (Cout, hid, 1, 1)
    w1t = jax.random.normal(k1, (hid, Cin), jnp.float32) * 0.1          # (hid, Cin)
    w2_raw = jax.random.normal(k2, (hid, hid, 3, 3), jnp.float32) * 0.1  # (cout, cin, kh, kw)
    w3t = jax.random.normal(k3, (Cout, hid), jnp.float32) * 0.1          # (Cout, hid)

    def bn_params(c, shift):
        return (1.0 + 0.1 * jnp.arange(c, dtype=jnp.float32),        # gamma
                0.05 * jnp.arange(c, dtype=jnp.float32) + shift,     # beta
                0.01 * jnp.arange(c, dtype=jnp.float32),             # running_mean
                1.0 + 0.02 * jnp.arange(c, dtype=jnp.float32))       # running_var

    params = {
        "w1t": w1t,
        "w2_raw": w2_raw,
        # tap t = 3*dh + dw  ->  (hid_out, hid_in) matrix  w2_raw[:, :, dh, dw]
        "w2taps": jnp.transpose(w2_raw, (2, 3, 0, 1)).reshape(9, hid, hid),
        "w3t": w3t,
        "bn1": bn_params(hid, 0.0),
        "bn2": bn_params(hid, 0.02),
        "alpha": jnp.array([0.25], jnp.float32),                      # nn.PReLU default
    }

    x = jax.random.normal(kx, (N, Cin, H, W), jnp.float32)

    out = jax.block_until_ready(bottleneck_regular(x, params))
    ref = jax.block_until_ready(bottleneck_reference(x, params))

    assert out.shape == (N, Cout, H, W)
    err = float(jnp.max(jnp.abs(out - ref)))
    assert jnp.allclose(out, ref, atol=1e-4, rtol=1e-4), err

    print("KERNEL_OK")
</pallas_src>

<mosaic_0001>
module attributes {stable_mosaic.version = 11 : i64} {
  func.func @bottleneck_kernel(%arg0: i32, %arg1: memref<1xf32, #tpu.memory_space<smem>>, %arg2: memref<1x16x256xf32, #tpu.memory_space<vmem>>, %arg3: memref<4x16xf32, #tpu.memory_space<vmem>>, %arg4: memref<4x1xf32, #tpu.memory_space<vmem>>, %arg5: memref<4x1xf32, #tpu.memory_space<vmem>>, %arg6: memref<9x4x4xf32, #tpu.memory_space<vmem>>, %arg7: memref<4x1xf32, #tpu.memory_space<vmem>>, %arg8: memref<4x1xf32, #tpu.memory_space<vmem>>, %arg9: memref<16x4xf32, #tpu.memory_space<vmem>>, %arg10: memref<9x1x256xf32, #tpu.memory_space<vmem>>, %arg11: memref<1x16x256xf32, #tpu.memory_space<vmem>>) attributes {dimension_semantics = [#tpu.dimension_semantics<parallel>], iteration_bounds = array<i64: 2>, scalar_prefetch = 0 : i64, scratch_operands = 0 : i64, tpu.core_type = #tpu.core_type<tc>, window_params = [{transform_indices = @transform_0, window_bounds = array<i64: 1>}, {transform_indices = @transform_1, window_bounds = array<i64: 1, 16, 256>}, {pipeline_mode = #tpu.pipeline_mode<synchronous>, transform_indices = @transform_2, window_bounds = array<i64: 4, 16>}, {pipeline_mode = #tpu.pipeline_mode<synchronous>, transform_indices = @transform_3, window_bounds = array<i64: 4, 1>}, {pipeline_mode = #tpu.pipeline_mode<synchronous>, transform_indices = @transform_4, window_bounds = array<i64: 4, 1>}, {pipeline_mode = #tpu.pipeline_mode<synchronous>, transform_indices = @transform_5, window_bounds = array<i64: 9, 4, 4>}, {pipeline_mode = #tpu.pipeline_mode<synchronous>, transform_indices = @transform_6, window_bounds = array<i64: 4, 1>}, {pipeline_mode = #tpu.pipeline_mode<synchronous>, transform_indices = @transform_7, window_bounds = array<i64: 4, 1>}, {pipeline_mode = #tpu.pipeline_mode<synchronous>, transform_indices = @transform_8, window_bounds = array<i64: 16, 4>}, {pipeline_mode = #tpu.pipeline_mode<synchronous>, transform_indices = @transform_9, window_bounds = array<i64: 9, 1, 256>}, {transform_indices = @transform_10, window_bounds = array<i64: 1, 16, 256>}]} {
    %c0 = arith.constant 0 : index
    %c0_0 = arith.constant 0 : index
    %c0_1 = arith.constant 0 : index
    %0 = vector.load %arg2[%c0, %c0_0, %c0_1] : memref<1x16x256xf32, #tpu.memory_space<vmem>>, vector<1x16x256xf32>
    %1 = vector.shape_cast %0 : vector<1x16x256xf32> to vector<16x256xf32>
    %c0_2 = arith.constant 0 : index
    %c0_3 = arith.constant 0 : index
    %2 = vector.load %arg3[%c0_2, %c0_3] : memref<4x16xf32, #tpu.memory_space<vmem>>, vector<4x16xf32>
    %cst = arith.constant dense<0.000000e+00> : vector<4x256xf32>
    %3 = tpu.matmul %2, %1, %cst {dimension_numbers = #tpu.dot_dimension_numbers<[1], [0], [0], [1], [0, 0, 1, 1], [], []>} : vector<4x16xf32>, vector<16x256xf32>, vector<4x256xf32> -> vector<4x256xf32>
    %c0_4 = arith.constant 0 : index
    %c0_5 = arith.constant 0 : index
    %4 = vector.load %arg4[%c0_4, %c0_5] : memref<4x1xf32, #tpu.memory_space<vmem>>, vector<4x1xf32>
    %5 = vector.broadcast %4 : vector<4x1xf32> to vector<4x256xf32>
    %6 = arith.mulf %3, %5 : vector<4x256xf32>
    %c0_6 = arith.constant 0 : index
    %c0_7 = arith.constant 0 : index
    %7 = vector.load %arg5[%c0_6, %c0_7] : memref<4x1xf32, #tpu.memory_space<vmem>>, vector<4x1xf32>
    %8 = vector.broadcast %7 : vector<4x1xf32> to vector<4x256xf32>
    %9 = arith.addf %6, %8 : vector<4x256xf32>
    %cst_8 = arith.constant 0.000000e+00 : f32
    %10 = vector.broadcast %cst_8 : f32 to vector<4x256xf32>
    %11 = arith.maximumf %9, %10 : vector<4x256xf32>
    %c4 = arith.constant 4 : index
    %c0_9 = arith.constant 0 : index
    %c0_10 = arith.constant 0 : index
    %12 = vector.load %arg6[%c4, %c0_9, %c0_10] : memref<9x4x4xf32, #tpu.memory_space<vmem>>, vector<1x4x4xf32>
    %13 = vector.shape_cast %12 : vector<1x4x4xf32> to vector<4x4xf32>
    %cst_11 = arith.constant dense<0.000000e+00> : vector<4x256xf32>
    %14 = tpu.matmul %13, %11, %cst_11 {dimension_numbers = #tpu.dot_dimension_numbers<[1], [0], [0], [1], [0, 0, 1, 1], [], []>} : vector<4x4xf32>, vector<4x256xf32>, vector<4x256xf32> -> vector<4x256xf32>
    %c17_i32 = arith.constant 17 : i32
    %15 = tpu.dynamic_rotate %11 by %c17_i32 dim 1 : vector<4x256xf32>, i32 -> vector<4x256xf32>
    %c0_12 = arith.constant 0 : index
    %c0_13 = arith.constant 0 : index
    %c0_14 = arith.constant 0 : index
    %16 = vector.load %arg10[%c0_12, %c0_13, %c0_14] : memref<9x1x256xf32, #tpu.memory_space<vmem>>, vector<1x1x256xf32>
    %17 = vector.shape_cast %16 : vector<1x1x256xf32> to vector<1x256xf32>
    %18 = vector.broadcast %17 : vector<1x256xf32> to vector<4x256xf32>
    %19 = arith.mulf %15, %18 : vector<4x256xf32>
    %c0_15 = arith.constant 0 : index
    %c0_16 = arith.constant 0 : index
    %c0_17 = arith.constant 0 : index
    %20 = vector.load %arg6[%c0_15, %c0_16, %c0_17] : memref<9x4x4xf32, #tpu.memory_space<vmem>>, vector<1x4x4xf32>
    %21 = vector.shape_cast %20 : vector<1x4x4xf32> to vector<4x4xf32>
    %cst_18 = arith.constant dense<0.000000e+00> : vector<4x256xf32>
    %22 = tpu.matmul %21, %19, %cst_18 {dimension_numbers = #tpu.dot_dimension_numbers<[1], [0], [0], [1], [0, 0, 1, 1], [], []>} : vector<4x4xf32>, vector<4x256xf32>, vector<4x256xf32> -> vector<4x256xf32>
    %23 = arith.addf %14, %22 : vector<4x256xf32>
    %c16_i32 = arith.constant 16 : i32
    %24 = tpu.dynamic_rotate %11 by %c16_i32 dim 1 : vector<4x256xf32>, i32 -> vector<4x256xf32>
    %c1 = arith.constant 1 : index
    %c0_19 = arith.constant 0 : index
    %c0_20 = arith.constant 0 : index
    %25 = vector.load %arg10[%c1, %c0_19, %c0_20] : memref<9x1x256xf32, #tpu.memory_space<vmem>>, vector<1x1x256xf32>
    %26 = vector.shape_cast %25 : vector<1x1x256xf32> to vector<1x256xf32>
    %27 = vector.broadcast %26 : vector<1x256xf32> to vector<4x256xf32>
    %28 = arith.mulf %24, %27 : vector<4x256xf32>
    %c1_21 = arith.constant 1 : index
    %c0_22 = arith.constant 0 : index
    %c0_23 = arith.constant 0 : index
    %29 = vector.load %arg6[%c1_21, %c0_22, %c0_23] : memref<9x4x4xf32, #tpu.memory_space<vmem>>, vector<1x4x4xf32>
    %30 = vector.shape_cast %29 : vector<1x4x4xf32> to vector<4x4xf32>
    %cst_24 = arith.constant dense<0.000000e+00> : vector<4x256xf32>
    %31 = tpu.matmul %30, %28, %cst_24 {dimension_numbers = #tpu.dot_dimension_numbers<[1], [0], [0], [1], [0, 0, 1, 1], [], []>} : vector<4x4xf32>, vector<4x256xf32>, vector<4x256xf32> -> vector<4x256xf32>
    %32 = arith.addf %23, %31 : vector<4x256xf32>
    %c15_i32 = arith.constant 15 : i32
    %33 = tpu.dynamic_rotate %11 by %c15_i32 dim 1 : vector<4x256xf32>, i32 -> vector<4x256xf32>
    %c2 = arith.constant 2 : index
    %c0_25 = arith.constant 0 : index
    %c0_26 = arith.constant 0 : index
    %34 = vector.load %arg10[%c2, %c0_25, %c0_26] : memref<9x1x256xf32, #tpu.memory_space<vmem>>, vector<1x1x256xf32>
    %35 = vector.shape_cast %34 : vector<1x1x256xf32> to vector<1x256xf32>
    %36 = vector.broadcast %35 : vector<1x256xf32> to vector<4x256xf32>
    %37 = arith.mulf %33, %36 : vector<4x256xf32>
    %c2_27 = arith.constant 2 : index
    %c0_28 = arith.constant 0 : index
    %c0_29 = arith.constant 0 : index
    %38 = vector.load %arg6[%c2_27, %c0_28, %c0_29] : memref<9x4x4xf32, #tpu.memory_space<vmem>>, vector<1x4x4xf32>
    %39 = vector.shape_cast %38 : vector<1x4x4xf32> to vector<4x4xf32>
    %cst_30 = arith.constant dense<0.000000e+00> : vector<4x256xf32>
    %40 = tpu.matmul %39, %37, %cst_30 {dimension_numbers = #tpu.dot_dimension_numbers<[1], [0], [0], [1], [0, 0, 1, 1], [], []>} : vector<4x4xf32>, vector<4x256xf32>, vector<4x256xf32> -> vector<4x256xf32>
    %41 = arith.addf %32, %40 : vector<4x256xf32>
    %c1_i32 = arith.constant 1 : i32
    %42 = tpu.dynamic_rotate %11 by %c1_i32 dim 1 : vector<4x256xf32>, i32 -> vector<4x256xf32>
    %c3 = arith.constant 3 : index
    %c0_31 = arith.constant 0 : index
    %c0_32 = arith.constant 0 : index
    %43 = vector.load %arg10[%c3, %c0_31, %c0_32] : memref<9x1x256xf32, #tpu.memory_space<vmem>>, vector<1x1x256xf32>
    %44 = vector.shape_cast %43 : vector<1x1x256xf32> to vector<1x256xf32>
    %45 = vector.broadcast %44 : vector<1x256xf32> to vector<4x256xf32>
    %46 = arith.mulf %42, %45 : vector<4x256xf32>
    %c3_33 = arith.constant 3 : index
    %c0_34 = arith.constant 0 : index
    %c0_35 = arith.constant 0 : index
    %47 = vector.load %arg6[%c3_33, %c0_34, %c0_35] : memref<9x4x4xf32, #tpu.memory_space<vmem>>, vector<1x4x4xf32>
    %48 = vector.shape_cast %47 : vector<1x4x4xf32> to vector<4x4xf32>
    %cst_36 = arith.constant dense<0.000000e+00> : vector<4x256xf32>
    %49 = tpu.matmul %48, %46, %cst_36 {dimension_numbers = #tpu.dot_dimension_numbers<[1], [0], [0], [1], [0, 0, 1, 1], [], []>} : vector<4x4xf32>, vector<4x256xf32>, vector<4x256xf32> -> vector<4x256xf32>
    %50 = arith.addf %41, %49 : vector<4x256xf32>
    %c255_i32 = arith.constant 255 : i32
    %51 = tpu.dynamic_rotate %11 by %c255_i32 dim 1 : vector<4x256xf32>, i32 -> vector<4x256xf32>
    %c5 = arith.constant 5 : index
    %c0_37 = arith.constant 0 : index
    %c0_38 = arith.constant 0 : index
    %52 = vector.load %arg10[%c5, %c0_37, %c0_38] : memref<9x1x256xf32, #tpu.memory_space<vmem>>, vector<1x1x256xf32>
    %53 = vector.shape_cast %52 : vector<1x1x256xf32> to vector<1x256xf32>
    %54 = vector.broadcast %53 : vector<1x256xf32> to vector<4x256xf32>
    %55 = arith.mulf %51, %54 : vector<4x256xf32>
    %c5_39 = arith.constant 5 : index
    %c0_40 = arith.constant 0 : index
    %c0_41 = arith.constant 0 : index
    %56 = vector.load %arg6[%c5_39, %c0_40, %c0_41] : memref<9x4x4xf32, #tpu.memory_space<vmem>>, vector<1x4x4xf32>
    %57 = vector.shape_cast %56 : vector<1x4x4xf32> to vector<4x4xf32>
    %cst_42 = arith.constant dense<0.000000e+00> : vector<4x256xf32>
    %58 = tpu.matmul %57, %55, %cst_42 {dimension_numbers = #tpu.dot_dimension_numbers<[1], [0], [0], [1], [0, 0, 1, 1], [], []>} : vector<4x4xf32>, vector<4x256xf32>, vector<4x256xf32> -> vector<4x256xf32>
    %59 = arith.addf %50, %58 : vector<4x256xf32>
    %c241_i32 = arith.constant 241 : i32
    %60 = tpu.dynamic_rotate %11 by %c241_i32 dim 1 : vector<4x256xf32>, i32 -> vector<4x256xf32>
    %c6 = arith.constant 6 : index
    %c0_43 = arith.constant 0 : index
    %c0_44 = arith.constant 0 : index
    %61 = vector.load %arg10[%c6, %c0_43, %c0_44] : memref<9x1x256xf32, #tpu.memory_space<vmem>>, vector<1x1x256xf32>
    %62 = vector.shape_cast %61 : vector<1x1x256xf32> to vector<1x256xf32>
    %63 = vector.broadcast %62 : vector<1x256xf32> to vector<4x256xf32>
    %64 = arith.mulf %60, %63 : vector<4x256xf32>
    %c6_45 = arith.constant 6 : index
    %c0_46 = arith.constant 0 : index
    %c0_47 = arith.constant 0 : index
    %65 = vector.load %arg6[%c6_45, %c0_46, %c0_47] : memref<9x4x4xf32, #tpu.memory_space<vmem>>, vector<1x4x4xf32>
    %66 = vector.shape_cast %65 : vector<1x4x4xf32> to vector<4x4xf32>
    %cst_48 = arith.constant dense<0.000000e+00> : vector<4x256xf32>
    %67 = tpu.matmul %66, %64, %cst_48 {dimension_numbers = #tpu.dot_dimension_numbers<[1], [0], [0], [1], [0, 0, 1, 1], [], []>} : vector<4x4xf32>, vector<4x256xf32>, vector<4x256xf32> -> vector<4x256xf32>
    %68 = arith.addf %59, %67 : vector<4x256xf32>
    %c240_i32 = arith.constant 240 : i32
    %69 = tpu.dynamic_rotate %11 by %c240_i32 dim 1 : vector<4x256xf32>, i32 -> vector<4x256xf32>
    %c7 = arith.constant 7 : index
    %c0_49 = arith.constant 0 : index
    %c0_50 = arith.constant 0 : index
    %70 = vector.load %arg10[%c7, %c0_49, %c0_50] : memref<9x1x256xf32, #tpu.memory_space<vmem>>, vector<1x1x256xf32>
    %71 = vector.shape_cast %70 : vector<1x1x256xf32> to vector<1x256xf32>
    %72 = vector.broadcast %71 : vector<1x256xf32> to vector<4x256xf32>
    %73 = arith.mulf %69, %72 : vector<4x256xf32>
    %c7_51 = arith.constant 7 : index
    %c0_52 = arith.constant 0 : index
    %c0_53 = arith.constant 0 : index
    %74 = vector.load %arg6[%c7_51, %c0_52, %c0_53] : memref<9x4x4xf32, #tpu.memory_space<vmem>>, vector<1x4x4xf32>
    %75 = vector.shape_cast %74 : vector<1x4x4xf32> to vector<4x4xf32>
    %cst_54 = arith.constant dense<0.000000e+00> : vector<4x256xf32>
    %76 = tpu.matmul %75, %73, %cst_54 {dimension_numbers = #tpu.dot_dimension_numbers<[1], [0], [0], [1], [0, 0, 1, 1], [], []>} : vector<4x4xf32>, vector<4x256xf32>, vector<4x256xf32> -> vector<4x256xf32>
    %77 = arith.addf %68, %76 : vector<4x256xf32>
    %c239_i32 = arith.constant 239 : i32
    %78 = tpu.dynamic_rotate %11 by %c239_i32 dim 1 : vector<4x256xf32>, i32 -> vector<4x256xf32>
    %c8 = arith.constant 8 : index
    %c0_55 = arith.constant 0 : index
    %c0_56 = arith.constant 0 : index
    %79 = vector.load %arg10[%c8, %c0_55, %c0_56] : memref<9x1x256xf32, #tpu.memory_space<vmem>>, vector<1x1x256xf32>
    %80 = vector.shape_cast %79 : vector<1x1x256xf32> to vector<1x256xf32>
    %81 = vector.broadcast %80 : vector<1x256xf32> to vector<4x256xf32>
    %82 = arith.mulf %78, %81 : vector<4x256xf32>
    %c8_57 = arith.constant 8 : index
    %c0_58 = arith.constant 0 : index
    %c0_59 = arith.constant 0 : index
    %83 = vector.load %arg6[%c8_57, %c0_58, %c0_59] : memref<9x4x4xf32, #tpu.memory_space<vmem>>, vector<1x4x4xf32>
    %84 = vector.shape_cast %83 : vector<1x4x4xf32> to vector<4x4xf32>
    %cst_60 = arith.constant dense<0.000000e+00> : vector<4x256xf32>
    %85 = tpu.matmul %84, %82, %cst_60 {dimension_numbers = #tpu.dot_dimension_numbers<[1], [0], [0], [1], [0, 0, 1, 1], [], []>} : vector<4x4xf32>, vector<4x256xf32>, vector<4x256xf32> -> vector<4x256xf32>
    %86 = arith.addf %77, %85 : vector<4x256xf32>
    %c0_61 = arith.constant 0 : index
    %c0_62 = arith.constant 0 : index
    %87 = vector.load %arg7[%c0_61, %c0_62] : memref<4x1xf32, #tpu.memory_space<vmem>>, vector<4x1xf32>
    %88 = vector.broadcast %87 : vector<4x1xf32> to vector<4x256xf32>
    %89 = arith.mulf %86, %88 : vector<4x256xf32>
    %c0_63 = arith.constant 0 : index
    %c0_64 = arith.constant 0 : index
    %90 = vector.load %arg8[%c0_63, %c0_64] : memref<4x1xf32, #tpu.memory_space<vmem>>, vector<4x1xf32>
    %91 = vector.broadcast %90 : vector<4x1xf32> to vector<4x256xf32>
    %92 = arith.addf %89, %91 : vector<4x256xf32>
    %cst_65 = arith.constant 0.000000e+00 : f32
    %93 = vector.broadcast %cst_65 : f32 to vector<4x256xf32>
    %94 = arith.maximumf %92, %93 : vector<4x256xf32>
    %c0_66 = arith.constant 0 : index
    %c0_67 = arith.constant 0 : index
    %95 = vector.load %arg9[%c0_66, %c0_67] : memref<16x4xf32, #tpu.memory_space<vmem>>, vector<16x4xf32>
    %cst_68 = arith.constant dense<0.000000e+00> : vector<16x256xf32>
    %96 = tpu.matmul %95, %94, %cst_68 {dimension_numbers = #tpu.dot_dimension_numbers<[1], [0], [0], [1], [0, 0, 1, 1], [], []>} : vector<16x4xf32>, vector<4x256xf32>, vector<16x256xf32> -> vector<16x256xf32>
    %97 = arith.addf %1, %96 : vector<16x256xf32>
    %c0_69 = arith.constant 0 : index
    %98 = memref.load %arg1[%c0_69] : memref<1xf32, #tpu.memory_space<smem>>
    %cst_70 = arith.constant 0.000000e+00 : f32
    %99 = vector.broadcast %cst_70 : f32 to vector<16x256xf32>
    %100 = arith.cmpf oge, %97, %99 : vector<16x256xf32>
    %101 = vector.broadcast %98 : f32 to vector<16x256xf32>
    %102 = arith.mulf %101, %97 : vector<16x256xf32>
    %103 = arith.select %100, %97, %102 : vector<16x256xi1>, vector<16x256xf32>
    %c0_71 = arith.constant 0 : index
    %c0_72 = arith.constant 0 : index
    %c0_73 = arith.constant 0 : index
    %104 = vector.load %arg11[%c0_71, %c0_72, %c0_73] : memref<1x16x256xf32, #tpu.memory_space<vmem>>, vector<1x16x256xf32>
    %105 = vector.shape_cast %104 : vector<1x16x256xf32> to vector<16x256xf32>
    %106 = vector.shape_cast %103 : vector<16x256xf32> to vector<1x16x256xf32>
    tpu.vector_store %arg11[%c0_71, %c0_72, %c0_73], %106 {strides = array<i32>} : memref<1x16x256xf32, #tpu.memory_space<vmem>>, vector<1x16x256xf32>,
    return
  }
  func.func @transform_0(%arg0: i32) -> i32 {
    %c0_i32 = arith.constant 0 : i32
    %c0_i32_0 = arith.constant 0 : i32
    return %c0_i32 : i32
  }
  func.func @transform_1(%arg0: i32) -> (i32, i32, i32) {
    %c0_i32 = arith.constant 0 : i32
    %c0_i32_0 = arith.constant 0 : i32
    %c0_i32_1 = arith.constant 0 : i32
    return %arg0, %c0_i32, %c0_i32_0 : i32, i32, i32
  }
  func.func @transform_2(%arg0: i32) -> (i32, i32) {
    %c0_i32 = arith.constant 0 : i32
    %c0_i32_0 = arith.constant 0 : i32
    %c0_i32_1 = arith.constant 0 : i32
    return %c0_i32, %c0_i32_0 : i32, i32
  }
  func.func @transform_3(%arg0: i32) -> (i32, i32) {
    %c0_i32 = arith.constant 0 : i32
    %c0_i32_0 = arith.constant 0 : i32
    %c0_i32_1 = arith.constant 0 : i32
    return %c0_i32, %c0_i32_0 : i32, i32
  }
  func.func @transform_4(%arg0: i32) -> (i32, i32) {
    %c0_i32 = arith.constant 0 : i32
    %c0_i32_0 = arith.constant 0 : i32
    %c0_i32_1 = arith.constant 0 : i32
    return %c0_i32, %c0_i32_0 : i32, i32
  }
  func.func @transform_5(%arg0: i32) -> (i32, i32, i32) {
    %c0_i32 = arith.constant 0 : i32
    %c0_i32_0 = arith.constant 0 : i32
    %c0_i32_1 = arith.constant 0 : i32
    %c0_i32_2 = arith.constant 0 : i32
    return %c0_i32, %c0_i32_0, %c0_i32_1 : i32, i32, i32
  }
  func.func @transform_6(%arg0: i32) -> (i32, i32) {
    %c0_i32 = arith.constant 0 : i32
    %c0_i32_0 = arith.constant 0 : i32
    %c0_i32_1 = arith.constant 0 : i32
    return %c0_i32, %c0_i32_0 : i32, i32
  }
  func.func @transform_7(%arg0: i32) -> (i32, i32) {
    %c0_i32 = arith.constant 0 : i32
    %c0_i32_0 = arith.constant 0 : i32
    %c0_i32_1 = arith.constant 0 : i32
    return %c0_i32, %c0_i32_0 : i32, i32
  }
  func.func @transform_8(%arg0: i32) -> (i32, i32) {
    %c0_i32 = arith.constant 0 : i32
    %c0_i32_0 = arith.constant 0 : i32
    %c0_i32_1 = arith.constant 0 : i32
    return %c0_i32, %c0_i32_0 : i32, i32
  }
  func.func @transform_9(%arg0: i32) -> (i32, i32, i32) {
    %c0_i32 = arith.constant 0 : i32
    %c0_i32_0 = arith.constant 0 : i32
    %c0_i32_1 = arith.constant 0 : i32
    %c0_i32_2 = arith.constant 0 : i32
    return %c0_i32, %c0_i32_0, %c0_i32_1 : i32, i32, i32
  }
  func.func @transform_10(%arg0: i32) -> (i32, i32, i32) {
    %c0_i32 = arith.constant 0 : i32
    %c0_i32_0 = arith.constant 0 : i32
    %c0_i32_1 = arith.constant 0 : i32
    return %arg0, %c0_i32, %c0_i32_0 : i32, i32, i32
  }
}

</mosaic_0001>

<llo_original>
// kernel: tpu_custom_call.1
$region0: #{tpu_custom_call.1}
  #allocation0 [shape = 'u32[]', space=smem, size = 0x4, offset = 0x4, fixed_abs, tag = 'smem constant byte address 0x4 - core index']
  #allocation1 [shape = 'u32[144,128]{1,0:T(1,128)}', space=vmem, size = 0x12000, scoped, tag = 'internal scratch']
  #allocation2 [shape = 'f32[1]{0:T(128)S(6)}', space=smem, size = 0x200, scoped, tag = 'scoped memory for tpu_custom_call.1']
  %s0 = inlined_call_operand.<no memory space> [shape: f32[1], index: 0, kind: input, shape index: {}]
  %s1 = inlined_call_operand.vmem [shape: f32[2,16,256], index: 1, kind: input, shape index: {}]
  %s2 = inlined_call_operand.hbm [shape: f32[4,16], index: 2, kind: input, shape index: {}]
  %s3 = inlined_call_operand.vmem [shape: f32[4,1], index: 3, kind: input, shape index: {}]
  %s4 = inlined_call_operand.vmem [shape: f32[4,1], index: 4, kind: input, shape index: {}]
  %s5 = inlined_call_operand.vmem [shape: f32[9,4,4], index: 5, kind: input, shape index: {}]
  %s6 = inlined_call_operand.vmem [shape: f32[4,1], index: 6, kind: input, shape index: {}]
  %s7 = inlined_call_operand.vmem [shape: f32[4,1], index: 7, kind: input, shape index: {}]
  %s8 = inlined_call_operand.vmem [shape: f32[16,4], index: 8, kind: input, shape index: {}]
  %s9 = inlined_call_operand.vmem [shape: f32[9,1,256], index: 9, kind: input, shape index: {}]
  %s10 = inlined_call_operand.hbm [shape: f32[2,16,256], index: 10, kind: output, shape index: {}]
  %s11 = sld [smem:[#allocation0]]
  $region77: #{tpu_custom_call.1} parent=0
    _
  %s13 = ssub.s32 1, %s11
  %s14 = scalar_select 0, %s13, %s11
  %15 = sst [smem:[#allocation2]] %s0
  $region1: #{tpu_custom_call.1} parent=0
    #allocation3 [shape = 'u8[2048]{0}', space=vmem, size = 0x800, scoped, tag = 'input window, operand 2, single buffered']
    #allocation4 [shape = 's32[2]{0}', space=sflag, size = 0x8, scoped, tag = 'scoped memory for tpu_custom_call.1']
    #allocation5 [shape = 's32[2]{0}', space=sflag, size = 0x8, scoped, tag = 'scoped memory for tpu_custom_call.1']
    #allocation6 [shape = 'u8[32768]{0}', space=vmem, size = 0x8000, scoped, tag = 'output window, operand 0']
    %16 = vsyncpa [#allocation4], 0
    %17 = vsyncpa [#allocation5], 0
    %s18 = scalar_lea.sflag [#allocation5], 1
    %19 = vsyncpa %s18, 0
    loop: start=0, step=1, limit=4
    $region2: #{tpu_custom_call.1} parent=1 // loop_pre_header
      _
    $region3: #{tpu_custom_call.1} parent=1 // loop_header
      %s21 = sphi 0, %s25
      %p22 = scmp.ge.s32.totalorder %s21, 4
      %s29 = sphi 0, %s29
      %s31 = sphi 0, %s29
      %s32 = sphi 0, %s31
      %s46 = sphi 0, %s32
      %s52 = sphi 0, %s54
      %s55 = sphi 0, %s52
      %s56 = sphi 0, %s55
      %s72 = sphi 0, %s56
      %s76 = sphi 0, %s76
      %s78 = sphi 0, %s76
      %s79 = sphi 0, %s78
      %s93 = sphi 0, %s79
      %s97 = sphi 0, %s97
      %s99 = sphi 0, %s97
      %s100 = sphi 0, %s99
      %s114 = sphi 0, %s100
      %s118 = sphi 0, %s118
      %s120 = sphi 0, %s118
      %s121 = sphi 0, %s120
      %s135 = sphi 0, %s121
      %s139 = sphi 0, %s139
      %s141 = sphi 0, %s139
      %s142 = sphi 0, %s141
      %s156 = sphi 0, %s142
      %s160 = sphi 0, %s160
      %s162 = sphi 0, %s160
      %s163 = sphi 0, %s162
      %s177 = sphi 0, %s163
      %s181 = sphi 0, %s181
      %s183 = sphi 0, %s181
      %s184 = sphi 0, %s183
      %s198 = sphi 0, %s184
      %s202 = sphi 0, %s202
      %s204 = sphi 0, %s202
      %s205 = sphi 0, %s204
      %s219 = sphi 0, %s205
      %s223 = sphi 0, %s223
      %s225 = sphi 0, %s223
      %s226 = sphi 0, %s225
      %s240 = sphi 0, %s226
      %s246 = sphi 0, %s248
      %s249 = sphi 0, %s246
      %s250 = sphi 0, %s249
      %s266 = sphi 0, %s250
    $region4: #{tpu_custom_call.1} parent=1 // loop_header_branch
      %24 = sbr.rel (%p22) target = $region8
    $region5: #{tpu_custom_call.1} parent=1 // loop_body
      %s26 = ssub.s32 %s21, 1
      %s27 = ssub.s32 %s21, 2
      %s28 = sadd.s32 %s21, 1
      %s30 = sadd.s32 %s29, 1
      %p33 = scmp.eq.s32.totalorder %s21, 1
      %p34 = scmp.ne.s32.totalorder %s29, %s31
      %p35 = scmp.eq.s32.totalorder %s21, 0
      %p36 = por %p34, %p35
      %p37 = scmp.ne.s32.totalorder %s29, %s31
      %p38 = scmp.eq.s32.totalorder %s26, 1
      %p39 = por %p37, %p38
      %p40 = scmp.ne.s32.totalorder %s31, %s32
      %p41 = scmp.eq.s32.totalorder %s26, 0
      %p42 = por %p40, %p41
      %p43 = scmp.ne.s32.totalorder %s31, %s32
      %p44 = scmp.eq.s32.totalorder %s27, 1
      %p45 = por %p43, %p44
      %p47 = scmp.ne.s32.totalorder %s32, %s46
      %p48 = scmp.eq.s32.totalorder %s27, 0
      %p49 = por %p47, %p48
      %s50 = ssub.s32 %s21, %s28
      %p51 = scmp.eq.s32.totalorder %s50, 0
      %s53 = sadd.s32 %s52, 1
      %s54 = scalar_select %p51, %s52, %s53
      %p57 = pneg %p51
      %p58 = scmp.eq.s32.totalorder %s21, 1
      %p59 = por %p57, %p58
      %p60 = scmp.ne.s32.totalorder %s52, %s55
      %p61 = scmp.eq.s32.totalorder %s21, 0
      %p62 = por %p60, %p61
      %p63 = scmp.ne.s32.totalorder %s52, %s55
      %p64 = scmp.eq.s32.totalorder %s26, 1
      %p65 = por %p63, %p64
      %p66 = scmp.ne.s32.totalorder %s55, %s56
      %p67 = scmp.eq.s32.totalorder %s26, 0
      %p68 = por %p66, %p67
      %p69 = scmp.ne.s32.totalorder %s55, %s56
      %p70 = scmp.eq.s32.totalorder %s27, 1
      %p71 = por %p69, %p70
      %p73 = scmp.ne.s32.totalorder %s56, %s72
      %p74 = scmp.eq.s32.totalorder %s27, 0
      %p75 = por %p73, %p74
      %s77 = sadd.s32 %s76, 1
      %p80 = scmp.eq.s32.totalorder %s21, 1
      %p81 = scmp.ne.s32.totalorder %s76, %s78
      %p82 = scmp.eq.s32.totalorder %s21, 0
      %p83 = por %p81, %p82
      %p84 = scmp.ne.s32.totalorder %s76, %s78
      %p85 = scmp.eq.s32.totalorder %s26, 1
      %p86 = por %p84, %p85
      %p87 = scmp.ne.s32.totalorder %s78, %s79
      %p88 = scmp.eq.s32.totalorder %s26, 0
      %p89 = por %p87, %p88
      %p90 = scmp.ne.s32.totalorder %s78, %s79
      %p91 = scmp.eq.s32.totalorder %s27, 1
      %p92 = por %p90, %p91
      %p94 = scmp.ne.s32.totalorder %s79, %s93
      %p95 = scmp.eq.s32.totalorder %s27, 0
      %p96 = por %p94, %p95
      %s98 = sadd.s32 %s97, 1
      %p101 = scmp.eq.s32.totalorder %s21, 1
      %p102 = scmp.ne.s32.totalorder %s97, %s99
      %p103 = scmp.eq.s32.totalorder %s21, 0
      %p104 = por %p102, %p103
      %p105 = scmp.ne.s32.totalorder %s97, %s99
      %p106 = scmp.eq.s32.totalorder %s26, 1
      %p107 = por %p105, %p106
      %p108 = scmp.ne.s32.totalorder %s99, %s100
      %p109 = scmp.eq.s32.totalorder %s26, 0
      %p110 = por %p108, %p109
      %p111 = scmp.ne.s32.totalorder %s99, %s100
      %p112 = scmp.eq.s32.totalorder %s27, 1
      %p113 = por %p111, %p112
      %p115 = scmp.ne.s32.totalorder %s100, %s114
      %p116 = scmp.eq.s32.totalorder %s27, 0
      %p117 = por %p115, %p116
      %s119 = sadd.s32 %s118, 1
      %p122 = scmp.eq.s32.totalorder %s21, 1
      %p123 = scmp.ne.s32.totalorder %s118, %s120
      %p124 = scmp.eq.s32.totalorder %s21, 0
      %p125 = por %p123, %p124
      %p126 = scmp.ne.s32.totalorder %s118, %s120
      %p127 = scmp.eq.s32.totalorder %s26, 1
      %p128 = por %p126, %p127
      %p129 = scmp.ne.s32.totalorder %s120, %s121
      %p130 = scmp.eq.s32.totalorder %s26, 0
      %p131 = por %p129, %p130
      %p132 = scmp.ne.s32.totalorder %s120, %s121
      %p133 = scmp.eq.s32.totalorder %s27, 1
      %p134 = por %p132, %p133
      %p136 = scmp.ne.s32.totalorder %s121, %s135
      %p137 = scmp.eq.s32.totalorder %s27, 0
      %p138 = por %p136, %p137
      %s140 = sadd.s32 %s139, 1
      %p143 = scmp.eq.s32.totalorder %s21, 1
      %p144 = scmp.ne.s32.totalorder %s139, %s141
      %p145 = scmp.eq.s32.totalorder %s21, 0
      %p146 = por %p144, %p145
      %p147 = scmp.ne.s32.totalorder %s139, %s141
      %p148 = scmp.eq.s32.totalorder %s26, 1
      %p149 = por %p147, %p148
      %p150 = scmp.ne.s32.totalorder %s141, %s142
      %p151 = scmp.eq.s32.totalorder %s26, 0
      %p152 = por %p150, %p151
      %p153 = scmp.ne.s32.totalorder %s141, %s142
      %p154 = scmp.eq.s32.totalorder %s27, 1
      %p155 = por %p153, %p154
      %p157 = scmp.ne.s32.totalorder %s142, %s156
      %p158 = scmp.eq.s32.totalorder %s27, 0
      %p159 = por %p157, %p158
      %s161 = sadd.s32 %s160, 1
      %p164 = scmp.eq.s32.totalorder %s21, 1
      %p165 = scmp.ne.s32.totalorder %s160, %s162
      %p166 = scmp.eq.s32.totalorder %s21, 0
      %p167 = por %p165, %p166
      %p168 = scmp.ne.s32.totalorder %s160, %s162
      %p169 = scmp.eq.s32.totalorder %s26, 1
      %p170 = por %p168, %p169
      %p171 = scmp.ne.s32.totalorder %s162, %s163
      %p172 = scmp.eq.s32.totalorder %s26, 0
      %p173 = por %p171, %p172
      %p174 = scmp.ne.s32.totalorder %s162, %s163
      %p175 = scmp.eq.s32.totalorder %s27, 1
      %p176 = por %p174, %p175
      %p178 = scmp.ne.s32.totalorder %s163, %s177
      %p179 = scmp.eq.s32.totalorder %s27, 0
      %p180 = por %p178, %p179
      %s182 = sadd.s32 %s181, 1
      %p185 = scmp.eq.s32.totalorder %s21, 1
      %p186 = scmp.ne.s32.totalorder %s181, %s183
      %p187 = scmp.eq.s32.totalorder %s21, 0
      %p188 = por %p186, %p187
      %p189 = scmp.ne.s32.totalorder %s181, %s183
      %p190 = scmp.eq.s32.totalorder %s26, 1
      %p191 = por %p189, %p190
      %p192 = scmp.ne.s32.totalorder %s183, %s184
      %p193 = scmp.eq.s32.totalorder %s26, 0
      %p194 = por %p192, %p193
      %p195 = scmp.ne.s32.totalorder %s183, %s184
      %p196 = scmp.eq.s32.totalorder %s27, 1
      %p197 = por %p195, %p196
      %p199 = scmp.ne.s32.totalorder %s184, %s198
      %p200 = scmp.eq.s32.totalorder %s27, 0
      %p201 = por %p199, %p200
      %s203 = sadd.s32 %s202, 1
      %p206 = scmp.eq.s32.totalorder %s21, 1
      %p207 = scmp.ne.s32.totalorder %s202, %s204
      %p208 = scmp.eq.s32.totalorder %s21, 0
      %p209 = por %p207, %p208
      %p210 = scmp.ne.s32.totalorder %s202, %s204
      %p211 = scmp.eq.s32.totalorder %s26, 1
      %p212 = por %p210, %p211
      %p213 = scmp.ne.s32.totalorder %s204, %s205
      %p214 = scmp.eq.s32.totalorder %s26, 0
      %p215 = por %p213, %p214
      %p216 = scmp.ne.s32.totalorder %s204, %s205
      %p217 = scmp.eq.s32.totalorder %s27, 1
      %p218 = por %p216, %p217
      %p220 = scmp.ne.s32.totalorder %s205, %s219
      %p221 = scmp.eq.s32.totalorder %s27, 0
      %p222 = por %p220, %p221
      %s224 = sadd.s32 %s223, 1
      %p227 = scmp.eq.s32.totalorder %s21, 1
      %p228 = scmp.ne.s32.totalorder %s223, %s225
      %p229 = scmp.eq.s32.totalorder %s21, 0
      %p230 = por %p228, %p229
      %p231 = scmp.ne.s32.totalorder %s223, %s225
      %p232 = scmp.eq.s32.totalorder %s26, 1
      %p233 = por %p231, %p232
      %p234 = scmp.ne.s32.totalorder %s225, %s226
      %p235 = scmp.eq.s32.totalorder %s26, 0
      %p236 = por %p234, %p235
      %p237 = scmp.ne.s32.totalorder %s225, %s226
      %p238 = scmp.eq.s32.totalorder %s27, 1
      %p239 = por %p237, %p238
      %p241 = scmp.ne.s32.totalorder %s226, %s240
      %p242 = scmp.eq.s32.totalorder %s27, 0
      %p243 = por %p241, %p242
      %s244 = ssub.s32 %s21, %s28
      %p245 = scmp.eq.s32.totalorder %s244, 0
      %s247 = sadd.s32 %s246, 1
      %s248 = scalar_select %p245, %s246, %s247
      %p251 = pneg %p245
      %p252 = scmp.eq.s32.totalorder %s21, 1
      %p253 = por %p251, %p252
      %p254 = scmp.ne.s32.totalorder %s246, %s249
      %p255 = scmp.eq.s32.totalorder %s21, 0
      %p256 = por %p254, %p255
      %p257 = scmp.ne.s32.totalorder %s246, %s249
      %p258 = scmp.eq.s32.totalorder %s26, 1
      %p259 = por %p257, %p258
      %p260 = scmp.ne.s32.totalorder %s249, %s250
      %p261 = scmp.eq.s32.totalorder %s26, 0
      %p262 = por %p260, %p261
      %p263 = scmp.ne.s32.totalorder %s249, %s250
      %p264 = scmp.eq.s32.totalorder %s27, 1
      %p265 = por %p263, %p264
      %p267 = scmp.ne.s32.totalorder %s250, %s266
      %p268 = scmp.eq.s32.totalorder %s27, 0
      %p269 = por %p267, %p268
      %p270 = scmp.le.s32.totalorder 1, %s21
      %p271 = scmp.lt.s32.totalorder %s21, 3
      %p272 = pnand %p270, %p271
      %p273 = pneg %p272
      // Predicated region
      $region9: #{tpu_custom_call.1} parent=5 // pred_check
        _
      $region10: #{tpu_custom_call.1} parent=5 // pred_check_branch
        %275 = sbr.rel (%p272) target = $region12
      $region11: #{tpu_custom_call.1} parent=5 // pred_region
        %s276 = ssub.s32 %s21, 1
        // Predicated region
        $region13: #{tpu_custom_call.1} parent=11 // pred_check
          %p277 = pneg %p42
        $region14: #{tpu_custom_call.1} parent=11 // pred_check_branch
          %279 = sbr.rel (%p277) target = $region16
        $region15: #{tpu_custom_call.1} parent=11 // pred_region
          _
        $region16: #{tpu_custom_call.1} parent=11 // pred_fallthru
          _
        // Predicated region
        $region17: #{tpu_custom_call.1} parent=11 // pred_check
          %p280 = pneg %p89
        $region18: #{tpu_custom_call.1} parent=11 // pred_check_branch
          %282 = sbr.rel (%p280) target = $region20
        $region19: #{tpu_custom_call.1} parent=11 // pred_region
          %s284 = ssub.s32 64, 64
          %285 = vsyncadd [#allocation4], %s284
          %s287 = sshll.u32 [#allocation3], 4
          %s288 = int_to_ptr.vmem [resolvable:$true] %s287
          %290 = dma.hbm_to_vmem [thread:$0]  %s2, 64, %s288, [#allocation4]
        $region20: #{tpu_custom_call.1} parent=11 // pred_fallthru
          _
        // Predicated region
        $region21: #{tpu_custom_call.1} parent=11 // pred_check
          %p291 = pneg %p110
        $region22: #{tpu_custom_call.1} parent=11 // pred_check_branch
          %293 = sbr.rel (%p291) target = $region24
        $region23: #{tpu_custom_call.1} parent=11 // pred_region
          _
        $region24: #{tpu_custom_call.1} parent=11 // pred_fallthru
          _
        // Predicated region
        $region25: #{tpu_custom_call.1} parent=11 // pred_check
          %p294 = pneg %p131
        $region26: #{tpu_custom_call.1} parent=11 // pred_check_branch
          %296 = sbr.rel (%p294) target = $region28
        $region27: #{tpu_custom_call.1} parent=11 // pred_region
          _
        $region28: #{tpu_custom_call.1} parent=11 // pred_fallthru
          _
        // Predicated region
        $region29: #{tpu_custom_call.1} parent=11 // pred_check
          %p297 = pneg %p152
        $region30: #{tpu_custom_call.1} parent=11 // pred_check_branch
          %299 = sbr.rel (%p297) target = $region32
        $region31: #{tpu_custom_call.1} parent=11 // pred_region
          _
        $region32: #{tpu_custom_call.1} parent=11 // pred_fallthru
          _
        // Predicated region
        $region33: #{tpu_custom_call.1} parent=11 // pred_check
          %p300 = pneg %p173
        $region34: #{tpu_custom_call.1} parent=11 // pred_check_branch
          %302 = sbr.rel (%p300) target = $region36
        $region35: #{tpu_custom_call.1} parent=11 // pred_region
          _
        $region36: #{tpu_custom_call.1} parent=11 // pred_fallthru
          _
        // Predicated region
        $region37: #{tpu_custom_call.1} parent=11 // pred_check
          %p303 = pneg %p194
        $region38: #{tpu_custom_call.1} parent=11 // pred_check_branch
          %305 = sbr.rel (%p303) target = $region40
        $region39: #{tpu_custom_call.1} parent=11 // pred_region
          _
        $region40: #{tpu_custom_call.1} parent=11 // pred_fallthru
          _
        // Predicated region
        $region41: #{tpu_custom_call.1} parent=11 // pred_check
          %p306 = pneg %p215
        $region42: #{tpu_custom_call.1} parent=11 // pred_check_branch
          %308 = sbr.rel (%p306) target = $region44
        $region43: #{tpu_custom_call.1} parent=11 // pred_region
          _
        $region44: #{tpu_custom_call.1} parent=11 // pred_fallthru
          _
        // Predicated region
        $region45: #{tpu_custom_call.1} parent=11 // pred_check
          %p309 = pneg %p236
        $region46: #{tpu_custom_call.1} parent=11 // pred_check_branch
          %311 = sbr.rel (%p309) target = $region48
        $region47: #{tpu_custom_call.1} parent=11 // pred_region
          _
        $region48: #{tpu_custom_call.1} parent=11 // pred_fallthru
          _
      $region12: #{tpu_custom_call.1} parent=5 // pred_fallthru
        _
      %p312 = scmp.lt.s32.totalorder %s21, 2
      // Predicated region
      $region49: #{tpu_custom_call.1} parent=5 // pred_check
        %p313 = pneg %p312
      $region50: #{tpu_custom_call.1} parent=5 // pred_check_branch
        %315 = sbr.rel (%p313) target = $region52
      $region51: #{tpu_custom_call.1} parent=5 // pred_region
        // Predicated region
        $region53: #{tpu_custom_call.1} parent=51 // pred_check
          %p316 = pneg %p62
        $region54: #{tpu_custom_call.1} parent=51 // pred_check_branch
          %318 = sbr.rel (%p316) target = $region56
        $region55: #{tpu_custom_call.1} parent=51 // pred_region
          %p319 = scmp.lt.s32.totalorder %s21, 1
          %s320 = scalar_select %p319, %s21, 1
          %s321 = smul.addr %s320, 4
          %s322 = smul.addr %s321, 8
          %s323 = scalar_lea.vmem %s1, %s322
        $region56: #{tpu_custom_call.1} parent=51 // pred_fallthru
          _
      $region52: #{tpu_custom_call.1} parent=5 // pred_fallthru
        _
      %p324 = scmp.le.s32.totalorder 1, %s21
      %p325 = scmp.lt.s32.totalorder %s21, 3
      %p326 = pnand %p324, %p325
      %p327 = pneg %p326
      // Predicated region
      $region57: #{tpu_custom_call.1} parent=5 // pred_check
        _
      $region58: #{tpu_custom_call.1} parent=5 // pred_check_branch
        %329 = sbr.rel (%p326) target = $region60
      $region59: #{tpu_custom_call.1} parent=5 // pred_region
        %s330 = ssub.s32 %s21, 1
        // Predicated region
        $region61: #{tpu_custom_call.1} parent=59 // pred_check
          %p331 = pneg %p89
        $region62: #{tpu_custom_call.1} parent=59 // pred_check_branch
          %333 = sbr.rel (%p331) target = $region64
        $region63: #{tpu_custom_call.1} parent=59 // pred_region
          %334 = dma.done [#allocation4], 64
        $region64: #{tpu_custom_call.1} parent=59 // pred_fallthru
          _
        %p335 = pneg %p42
        %p336 = pneg %p39
        %p337 = scmp.lt.s32.totalorder %s26, 1
        %s338 = scalar_select %p337, %s26, 1
        %s339 = smul.addr %s338, 4
        %s340 = smul.addr %s339, 8
        %s341 = scalar_lea.vmem %s1, %s340
        %p342 = pneg %p68
        %p343 = pneg %p65
        %p344 = pneg %p89
        %p345 = pneg %p86
        %p346 = pneg %p110
        %p347 = pneg %p107
        %p348 = pneg %p131
        %p349 = pneg %p128
        %p350 = pneg %p152
        %p351 = pneg %p149
        %p352 = pneg %p173
        %p353 = pneg %p170
        %p354 = pneg %p194
        %p355 = pneg %p191
        %p356 = pneg %p215
        %p357 = pneg %p212
        %p358 = pneg %p236
        %p359 = pneg %p233
        %p360 = pneg %p262
        %p361 = pneg %p259
        %s362 = sand.u32 %s249, 1
        %s363 = scalar_lea.sflag [#allocation5], %s362
        %s364 = sand.u32 %s249, 1
        %s365 = smul.addr %s364, 32
        %s366 = scalar_lea.vmem [#allocation6], %s365
        %p367 = scmp.lt.s32.totalorder %s26, 1
        %s368 = scalar_select %p367, %s26, 1
        %s369 = smul.addr %s368, 4
        %s370 = smul.addr %s369, 8
        %s371 = scalar_lea.vmem %s1, %s370
        %v372 = vld [vmem:[%s371] sm:$0xff]
        %v373 = vld [vmem:[%s371 + $0x8] sm:$0xff]
        %v374 = vld [vmem:[%s371 + $0x10] sm:$0xff]
        %v375 = vld [vmem:[%s371 + $0x18] sm:$0xff]
        %v376 = vld [vmem:[#allocation3] sm:$0xf]
        %vm377 = vcmask 130048
        %v379 = vsel %vm377, %v376, 0
        %381 = vmatprep.subr.mxu0 %v373
        %382 = vmatpush1.msra.mxu0 %v372
        %383 = vmatprep.subr.mxu0 %v375
        %384 = vmatpush1.msra.mxu0 %v374
        %385 = vmatprep.subr.mxu0 0.0
        %386 = vmatpush1.msra.mxu0 0.0
        %387 = vmatprep.subr.mxu0 0.0
        %388 = vmatpush1.msra.mxu0 0.0
        %389 = vmatprep.subr.mxu0 0.0
        %390 = vmatpush1.msra.mxu0 0.0
        %391 = vmatprep.subr.mxu0 0.0
        %392 = vmatpush1.msra.mxu0 0.0
        %393 = vmatprep.subr.mxu0 0.0
        %394 = vmatpush1.msra.mxu0 0.0
        %395 = vmatprep.subr.mxu0 0.0
        %396 = vmatpush1.msra.mxu0 0.0
        %397 = vmatprep.subr.mxu0 0.0
        %398 = vmatpush1.msra.mxu0 0.0
        %399 = vmatprep.subr.mxu0 0.0
        %400 = vmatpush1.msra.mxu0 0.0
        %401 = vmatprep.subr.mxu0 0.0
        %402 = vmatpush1.msra.mxu0 0.0
        %403 = vmatprep.subr.mxu0 0.0
        %404 = vmatpush1.msra.mxu0 0.0
        %405 = vmatprep.subr.mxu0 0.0
        %406 = vmatpush1.msra.mxu0 0.0
        %407 = vmatprep.subr.mxu0 0.0
        %408 = vmatpush1.msra.mxu0 0.0
        %409 = vmatprep.subr.mxu0 0.0
        %410 = vmatpush1.msra.mxu0 0.0
        %411 = vmatprep.subr.mxu0 0.0
        %412 = vmatpush1.msra.mxu0 0.0
        %413 = vmatprep.subr.mxu0 0.0
        %414 = vmatpush1.msra.mxu0 0.0
        %415 = vmatprep.subr.mxu0 0.0
        %416 = vmatpush1.msra.mxu0 0.0
        %417 = vmatprep.subr.mxu0 0.0
        %418 = vmatpush1.msra.mxu0 0.0
        %419 = vmatprep.subr.mxu0 0.0
        %420 = vmatpush1.msra.mxu0 0.0
        %421 = vmatprep.subr.mxu0 0.0
        %422 = vmatpush1.msra.mxu0 0.0
        %423 = vmatprep.subr.mxu0 0.0
        %424 = vmatpush1.msra.mxu0 0.0
        %425 = vmatprep.subr.mxu0 0.0
        %426 = vmatpush1.msra.mxu0 0.0
        %427 = vmatprep.subr.mxu0 0.0
        %428 = vmatpush1.msra.mxu0 0.0
        %429 = vmatprep.subr.mxu0 0.0
        %430 = vmatpush1.msra.mxu0 0.0
        %431 = vmatprep.subr.mxu0 0.0
        %432 = vmatpush1.msra.mxu0 0.0
        %433 = vmatprep.subr.mxu0 0.0
        %434 = vmatpush1.msra.mxu0 0.0
        %435 = vmatprep.subr.mxu0 0.0
        %436 = vmatpush1.msra.mxu0 0.0
        %437 = vmatprep.subr.mxu0 0.0
        %438 = vmatpush1.msra.mxu0 0.0
        %439 = vmatprep.subr.mxu0 0.0
        %440 = vmatpush1.msra.mxu0 0.0
        %441 = vmatprep.subr.mxu0 0.0
        %442 = vmatpush1.msra.mxu0 0.0
        %443 = vmatprep.subr.mxu0 0.0
        %444 = vmatpush1.msra.mxu0 0.0
        %445 = vmatprep.mubr.f32.mxu0 0.0
        %446 = vmatmul.mubr.f32.gmra.mrb[0].mxu0 %v379
        %v447 = vpop.f32.mrb[0].mxu0
        %v448 = vadd.f32 0.0, %v447
        %v449 = vpop.f32.mrb[0].mxu0
        %v450 = vadd.f32 0.0, %v449
        %451 = vdwg.mxu0
        %v452 = vld [vmem:[%s3] sm:$0xf]
        %454 = vset.pattern.permute.xlu0 0
        %455 = vperm.xlu0 %454, %v452
        %v456 = vpop.permute.xlu0 %455
        %v458 = vmul.f32 %v448, %v456
        %v459 = vmul.f32 %v450, %v456
        %v460 = vld [vmem:[%s4] sm:$0xf]
        %462 = vset.pattern.permute.xlu0 0
        %463 = vperm.xlu0 %462, %v460
        %v464 = vpop.permute.xlu0 %463
        %v466 = vadd.f32 %v458, %v464
        %v467 = vadd.f32 %v459, %v464
        %v468 = vmax.f32 %v466, 0.0
        %v469 = vmax.f32 %v467, 0.0
        %s470 = scalar_lea.vmem %s5, 16
        %v471 = vld [vmem:[%s470] sm:$0xf]
        %472 = vrot.lane.b32.xlu0 %v468, 17
        %v473 = vpop.permute.xlu0 %472
        %474 = vrot.lane.b32.xlu0 %v469, 17
        %v475 = vpop.permute.xlu0 %474
        %v476 = vlaneseq
        %v477 = vand.u32 %v476, 127
        %vm478 = vcmp.lt.s32.totalorder %v477, 17
        %v479 = vsel %vm478, %v473, %v475
        %v480 = vsel %vm478, %v475, %v473
        %v481 = vld [vmem:[%s9] sm:$0x3]
        %v483 = vlaneseq
        %v484 = vshrl.u32 %v483, 7
        %v485 = vsub.s32 0, %v484
        %v486 = vrot.slane %v481, %v485
        %v487 = vlaneseq
        %v488 = vshrl.u32 %v487, 7
        %v489 = vsub.s32 1, %v488
        %v490 = vrot.slane %v481, %v489
        %v493 = vmul.f32 %v480, %v486
        %v494 = vmul.f32 %v479, %v490
        %v495 = vld [vmem:[%s5] sm:$0xf]
        %vm496 = vcmask 31744
        %v498 = vsel %vm496, %v495, 0
        %vm500 = vcmask 1043456
        %v502 = vsel %vm500, %v493, 0
        %v505 = vsel %vm500, %v494, 0
        %507 = vmatprep.subr.mxu0 %v505
        %508 = vmatpush1.msra.mxu0 %v502
        %509 = vmatprep.subr.mxu0 0.0
        %510 = vmatpush1.msra.mxu0 0.0
        %511 = vmatprep.subr.mxu0 0.0
        %512 = vmatpush1.msra.mxu0 0.0
        %513 = vmatprep.subr.mxu0 0.0
        %514 = vmatpush1.msra.mxu0 0.0
        %515 = vmatprep.subr.mxu0 0.0
        %516 = vmatpush1.msra.mxu0 0.0
        %517 = vmatprep.subr.mxu0 0.0
        %518 = vmatpush1.msra.mxu0 0.0
        %519 = vmatprep.subr.mxu0 0.0
        %520 = vmatpush1.msra.mxu0 0.0
        %521 = vmatprep.subr.mxu0 0.0
        %522 = vmatpush1.msra.mxu0 0.0
        %523 = vmatprep.subr.mxu0 0.0
        %524 = vmatpush1.msra.mxu0 0.0
        %525 = vmatprep.subr.mxu0 0.0
        %526 = vmatpush1.msra.mxu0 0.0
        %527 = vmatprep.subr.mxu0 0.0
        %528 = vmatpush1.msra.mxu0 0.0
        %529 = vmatprep.subr.mxu0 0.0
        %530 = vmatpush1.msra.mxu0 0.0
        %531 = vmatprep.subr.mxu0 0.0
        %532 = vmatpush1.msra.mxu0 0.0
        %533 = vmatprep.subr.mxu0 0.0
        %534 = vmatpush1.msra.mxu0 0.0
        %535 = vmatprep.subr.mxu0 0.0
        %536 = vmatpush1.msra.mxu0 0.0
        %537 = vmatprep.subr.mxu0 0.0
        %538 = vmatpush1.msra.mxu0 0.0
        %539 = vmatprep.subr.mxu0 0.0
        %540 = vmatpush1.msra.mxu0 0.0
        %541 = vmatprep.subr.mxu0 0.0
        %542 = vmatpush1.msra.mxu0 0.0
        %543 = vmatprep.subr.mxu0 0.0
        %544 = vmatpush1.msra.mxu0 0.0
        %545 = vmatprep.subr.mxu0 0.0
        %546 = vmatpush1.msra.mxu0 0.0
        %547 = vmatprep.subr.mxu0 0.0
        %548 = vmatpush1.msra.mxu0 0.0
        %549 = vmatprep.subr.mxu0 0.0
        %550 = vmatpush1.msra.mxu0 0.0
        %551 = vmatprep.subr.mxu0 0.0
        %552 = vmatpush1.msra.mxu0 0.0
        %553 = vmatprep.subr.mxu0 0.0
        %554 = vmatpush1.msra.mxu0 0.0
        %555 = vmatprep.subr.mxu0 0.0
        %556 = vmatpush1.msra.mxu0 0.0
        %557 = vmatprep.subr.mxu0 0.0
        %558 = vmatpush1.msra.mxu0 0.0
        %559 = vmatprep.subr.mxu0 0.0
        %560 = vmatpush1.msra.mxu0 0.0
        %561 = vmatprep.subr.mxu0 0.0
        %562 = vmatpush1.msra.mxu0 0.0
        %563 = vmatprep.subr.mxu0 0.0
        %564 = vmatpush1.msra.mxu0 0.0
        %565 = vmatprep.subr.mxu0 0.0
        %566 = vmatpush1.msra.mxu0 0.0
        %567 = vmatprep.subr.mxu0 0.0
        %568 = vmatpush1.msra.mxu0 0.0
        %569 = vmatprep.subr.mxu0 0.0
        %570 = vmatpush1.msra.mxu0 0.0
        %571 = vmatprep.mubr.f32.mxu0 0.0
        %572 = vmatmul.mubr.f32.gmra.mrb[0].mxu0 %v498
        %v573 = vpop.f32.mrb[0].mxu0
        %v574 = vadd.f32 0.0, %v573
        %v575 = vpop.f32.mrb[0].mxu0
        %v576 = vadd.f32 0.0, %v575
        %577 = vdwg.mxu0
        %v579 = vsel %vm496, %v471, 0
        %v582 = vsel %vm500, %v468, 0
        %v585 = vsel %vm500, %v469, 0
        %587 = vmatprep.subr.mxu0 %v585
        %588 = vmatpush1.msra.mxu0 %v582
        %589 = vmatprep.subr.mxu0 0.0
        %590 = vmatpush1.msra.mxu0 0.0
        %591 = vmatprep.subr.mxu0 0.0
        %592 = vmatpush1.msra.mxu0 0.0
        %593 = vmatprep.subr.mxu0 0.0
        %594 = vmatpush1.msra.mxu0 0.0
        %595 = vmatprep.subr.mxu0 0.0
        %596 = vmatpush1.msra.mxu0 0.0
        %597 = vmatprep.subr.mxu0 0.0
        %598 = vmatpush1.msra.mxu0 0.0
        %599 = vmatprep.subr.mxu0 0.0
        %600 = vmatpush1.msra.mxu0 0.0
        %601 = vmatprep.subr.mxu0 0.0
        %602 = vmatpush1.msra.mxu0 0.0
        %603 = vmatprep.subr.mxu0 0.0
        %604 = vmatpush1.msra.mxu0 0.0
        %605 = vmatprep.subr.mxu0 0.0
        %606 = vmatpush1.msra.mxu0 0.0
        %607 = vmatprep.subr.mxu0 0.0
        %608 = vmatpush1.msra.mxu0 0.0
        %609 = vmatprep.subr.mxu0 0.0
        %610 = vmatpush1.msra.mxu0 0.0
        %611 = vmatprep.subr.mxu0 0.0
        %612 = vmatpush1.msra.mxu0 0.0
        %613 = vmatprep.subr.mxu0 0.0
        %614 = vmatpush1.msra.mxu0 0.0
        %615 = vmatprep.subr.mxu0 0.0
        %616 = vmatpush1.msra.mxu0 0.0
        %617 = vmatprep.subr.mxu0 0.0
        %618 = vmatpush1.msra.mxu0 0.0
        %619 = vmatprep.subr.mxu0 0.0
        %620 = vmatpush1.msra.mxu0 0.0
        %621 = vmatprep.subr.mxu0 0.0
        %622 = vmatpush1.msra.mxu0 0.0
        %623 = vmatprep.subr.mxu0 0.0
        %624 = vmatpush1.msra.mxu0 0.0
        %625 = vmatprep.subr.mxu0 0.0
        %626 = vmatpush1.msra.mxu0 0.0
        %627 = vmatprep.subr.mxu0 0.0
        %628 = vmatpush1.msra.mxu0 0.0
        %629 = vmatprep.subr.mxu0 0.0
        %630 = vmatpush1.msra.mxu0 0.0
        %631 = vmatprep.subr.mxu0 0.0
        %632 = vmatpush1.msra.mxu0 0.0
        %633 = vmatprep.subr.mxu0 0.0
        %634 = vmatpush1.msra.mxu0 0.0
        %635 = vmatprep.subr.mxu0 0.0
        %636 = vmatpush1.msra.mxu0 0.0
        %637 = vmatprep.subr.mxu0 0.0
        %638 = vmatpush1.msra.mxu0 0.0
        %639 = vmatprep.subr.mxu0 0.0
        %640 = vmatpush1.msra.mxu0 0.0
        %641 = vmatprep.subr.mxu0 0.0
        %642 = vmatpush1.msra.mxu0 0.0
        %643 = vmatprep.subr.mxu0 0.0
        %644 = vmatpush1.msra.mxu0 0.0
        %645 = vmatprep.subr.mxu0 0.0
        %646 = vmatpush1.msra.mxu0 0.0
        %647 = vmatprep.subr.mxu0 0.0
        %648 = vmatpush1.msra.mxu0 0.0
        %649 = vmatprep.subr.mxu0 0.0
        %650 = vmatpush1.msra.mxu0 0.0
        %651 = vmatprep.mubr.f32.mxu0 0.0
        %652 = vmatmul.mubr.f32.gmra.mrb[0].mxu0 %v579
        %v653 = vpop.f32.mrb[0].mxu0
        %v654 = vadd.f32 %v574, %v653
        %v655 = vpop.f32.mrb[0].mxu0
        %v656 = vadd.f32 %v576, %v655
        %657 = vdwg.mxu0
        %658 = vrot.lane.b32.xlu0 %v468, 16
        %v659 = vpop.permute.xlu0 %658
        %660 = vrot.lane.b32.xlu0 %v469, 16
        %v661 = vpop.permute.xlu0 %660
        %vm662 = vcmp.lt.s32.totalorder %v477, 16
        %v663 = vsel %vm662, %v659, %v661
        %v664 = vsel %vm662, %v661, %v659
        %s665 = scalar_lea.vmem %s9, 2
        %v666 = vld [vmem:[%s665] sm:$0x3]
        %v668 = vlaneseq
        %v669 = vshrl.u32 %v668, 7
        %v670 = vsub.s32 0, %v669
        %v671 = vrot.slane %v666, %v670
        %v672 = vlaneseq
        %v673 = vshrl.u32 %v672, 7
        %v674 = vsub.s32 1, %v673
        %v675 = vrot.slane %v666, %v674
        %v678 = vmul.f32 %v664, %v671
        %v679 = vmul.f32 %v663, %v675
        %s680 = scalar_lea.vmem %s5, 4
        %v681 = vld [vmem:[%s680] sm:$0xf]
        %v683 = vsel %vm496, %v681, 0
        %v686 = vsel %vm500, %v678, 0
        %v689 = vsel %vm500, %v679, 0
        %691 = vmatprep.subr.mxu0 %v689
        %692 = vmatpush1.msra.mxu0 %v686
        %693 = vmatprep.subr.mxu0 0.0
        %694 = vmatpush1.msra.mxu0 0.0
        %695 = vmatprep.subr.mxu0 0.0
        %696 = vmatpush1.msra.mxu0 0.0
        %697 = vmatprep.subr.mxu0 0.0
        %698 = vmatpush1.msra.mxu0 0.0
        %699 = vmatprep.subr.mxu0 0.0
        %700 = vmatpush1.msra.mxu0 0.0
        %701 = vmatprep.subr.mxu0 0.0
        %702 = vmatpush1.msra.mxu0 0.0
        %703 = vmatprep.subr.mxu0 0.0
        %704 = vmatpush1.msra.mxu0 0.0
        %705 = vmatprep.subr.mxu0 0.0
        %706 = vmatpush1.msra.mxu0 0.0
        %707 = vmatprep.subr.mxu0 0.0
        %708 = vmatpush1.msra.mxu0 0.0
        %709 = vmatprep.subr.mxu0 0.0
        %710 = vmatpush1.msra.mxu0 0.0
        %711 = vmatprep.subr.mxu0 0.0
        %712 = vmatpush1.msra.mxu0 0.0
        %713 = vmatprep.subr.mxu0 0.0
        %714 = vmatpush1.msra.mxu0 0.0
        %715 = vmatprep.subr.mxu0 0.0
        %716 = vmatpush1.msra.mxu0 0.0
        %717 = vmatprep.subr.mxu0 0.0
        %718 = vmatpush1.msra.mxu0 0.0
        %719 = vmatprep.subr.mxu0 0.0
        %720 = vmatpush1.msra.mxu0 0.0
        %721 = vmatprep.subr.mxu0 0.0
        %722 = vmatpush1.msra.mxu0 0.0
        %723 = vmatprep.subr.mxu0 0.0
        %724 = vmatpush1.msra.mxu0 0.0
        %725 = vmatprep.subr.mxu0 0.0
        %726 = vmatpush1.msra.mxu0 0.0
        %727 = vmatprep.subr.mxu0 0.0
        %728 = vmatpush1.msra.mxu0 0.0
        %729 = vmatprep.subr.mxu0 0.0
        %730 = vmatpush1.msra.mxu0 0.0
        %731 = vmatprep.subr.mxu0 0.0
        %732 = vmatpush1.msra.mxu0 0.0
        %733 = vmatprep.subr.mxu0 0.0
        %734 = vmatpush1.msra.mxu0 0.0
        %735 = vmatprep.subr.mxu0 0.0
        %736 = vmatpush1.msra.mxu0 0.0
        %737 = vmatprep.subr.mxu0 0.0
        %738 = vmatpush1.msra.mxu0 0.0
        %739 = vmatprep.subr.mxu0 0.0
        %740 = vmatpush1.msra.mxu0 0.0
        %741 = vmatprep.subr.mxu0 0.0
        %742 = vmatpush1.msra.mxu0 0.0
        %743 = vmatprep.subr.mxu0 0.0
        %744 = vmatpush1.msra.mxu0 0.0
        %745 = vmatprep.subr.mxu0 0.0
        %746 = vmatpush1.msra.mxu0 0.0
        %747 = vmatprep.subr.mxu0 0.0
        %748 = vmatpush1.msra.mxu0 0.0
        %749 = vmatprep.subr.mxu0 0.0
        %750 = vmatpush1.msra.mxu0 0.0
        %751 = vmatprep.subr.mxu0 0.0
        %752 = vmatpush1.msra.mxu0 0.0
        %753 = vmatprep.subr.mxu0 0.0
        %754 = vmatpush1.msra.mxu0 0.0
        %755 = vmatprep.mubr.f32.mxu0 0.0
        %756 = vmatmul.mubr.f32.gmra.mrb[0].mxu0 %v683
        %v757 = vpop.f32.mrb[0].mxu0
        %v758 = vadd.f32 0.0, %v757
        %v759 = vpop.f32.mrb[0].mxu0
        %v760 = vadd.f32 0.0, %v759
        %761 = vdwg.mxu0
        %v762 = vadd.f32 %v654, %v758
        %v763 = vadd.f32 %v656, %v760
        %764 = vrot.lane.b32.xlu0 %v468, 15
        %v765 = vpop.permute.xlu0 %764
        %766 = vrot.lane.b32.xlu0 %v469, 15
        %v767 = vpop.permute.xlu0 %766
        %vm768 = vcmp.lt.s32.totalorder %v477, 15
        %v769 = vsel %vm768, %v765, %v767
        %v770 = vsel %vm768, %v767, %v765
        %s771 = scalar_lea.vmem %s9, 4
        %v772 = vld [vmem:[%s771] sm:$0x3]
        %v774 = vlaneseq
        %v775 = vshrl.u32 %v774, 7
        %v776 = vsub.s32 0, %v775
        %v777 = vrot.slane %v772, %v776
        %v778 = vlaneseq
        %v779 = vshrl.u32 %v778, 7
        %v780 = vsub.s32 1, %v779
        %v781 = vrot.slane %v772, %v780
        %v784 = vmul.f32 %v770, %v777
        %v785 = vmul.f32 %v769, %v781
        %s786 = scalar_lea.vmem %s5, 8
        %v787 = vld [vmem:[%s786] sm:$0xf]
        %v789 = vsel %vm496, %v787, 0
        %v792 = vsel %vm500, %v784, 0
        %v795 = vsel %vm500, %v785, 0
        %797 = vmatprep.subr.mxu0 %v795
        %798 = vmatpush1.msra.mxu0 %v792
        %799 = vmatprep.subr.mxu0 0.0
        %800 = vmatpush1.msra.mxu0 0.0
        %801 = vmatprep.subr.mxu0 0.0
        %802 = vmatpush1.msra.mxu0 0.0
        %803 = vmatprep.subr.mxu0 0.0
        %804 = vmatpush1.msra.mxu0 0.0
        %805 = vmatprep.subr.mxu0 0.0
        %806 = vmatpush1.msra.mxu0 0.0
        %807 = vmatprep.subr.mxu0 0.0
        %808 = vmatpush1.msra.mxu0 0.0
        %809 = vmatprep.subr.mxu0 0.0
        %810 = vmatpush1.msra.mxu0 0.0
        %811 = vmatprep.subr.mxu0 0.0
        %812 = vmatpush1.msra.mxu0 0.0
        %813 = vmatprep.subr.mxu0 0.0
        %814 = vmatpush1.msra.mxu0 0.0
        %815 = vmatprep.subr.mxu0 0.0
        %816 = vmatpush1.msra.mxu0 0.0
        %817 = vmatprep.subr.mxu0 0.0
        %818 = vmatpush1.msra.mxu0 0.0
        %819 = vmatprep.subr.mxu0 0.0
        %820 = vmatpush1.msra.mxu0 0.0
        %821 = vmatprep.subr.mxu0 0.0
        %822 = vmatpush1.msra.mxu0 0.0
        %823 = vmatprep.subr.mxu0 0.0
        %824 = vmatpush1.msra.mxu0 0.0
        %825 = vmatprep.subr.mxu0 0.0
        %826 = vmatpush1.msra.mxu0 0.0
        %827 = vmatprep.subr.mxu0 0.0
        %828 = vmatpush1.msra.mxu0 0.0
        %829 = vmatprep.subr.mxu0 0.0
        %830 = vmatpush1.msra.mxu0 0.0
        %831 = vmatprep.subr.mxu0 0.0
        %832 = vmatpush1.msra.mxu0 0.0
        %833 = vmatprep.subr.mxu0 0.0
        %834 = vmatpush1.msra.mxu0 0.0
        %835 = vmatprep.subr.mxu0 0.0
        %836 = vmatpush1.msra.mxu0 0.0
        %837 = vmatprep.subr.mxu0 0.0
        %838 = vmatpush1.msra.mxu0 0.0
        %839 = vmatprep.subr.mxu0 0.0
        %840 = vmatpush1.msra.mxu0 0.0
        %841 = vmatprep.subr.mxu0 0.0
        %842 = vmatpush1.msra.mxu0 0.0
        %843 = vmatprep.subr.mxu0 0.0
        %844 = vmatpush1.msra.mxu0 0.0
        %845 = vmatprep.subr.mxu0 0.0
        %846 = vmatpush1.msra.mxu0 0.0
        %847 = vmatprep.subr.mxu0 0.0
        %848 = vmatpush1.msra.mxu0 0.0
        %849 = vmatprep.subr.mxu0 0.0
        %850 = vmatpush1.msra.mxu0 0.0
        %851 = vmatprep.subr.mxu0 0.0
        %852 = vmatpush1.msra.mxu0 0.0
        %853 = vmatprep.subr.mxu0 0.0
        %854 = vmatpush1.msra.mxu0 0.0
        %855 = vmatprep.subr.mxu0 0.0
        %856 = vmatpush1.msra.mxu0 0.0
        %857 = vmatprep.subr.mxu0 0.0
        %858 = vmatpush1.msra.mxu0 0.0
        %859 = vmatprep.subr.mxu0 0.0
        %860 = vmatpush1.msra.mxu0 0.0
        %861 = vmatprep.mubr.f32.mxu0 0.0
        %862 = vmatmul.mubr.f32.gmra.mrb[0].mxu0 %v789
        %v863 = vpop.f32.mrb[0].mxu0
        %v864 = vadd.f32 0.0, %v863
        %v865 = vpop.f32.mrb[0].mxu0
        %v866 = vadd.f32 0.0, %v865
        %867 = vdwg.mxu0
        %v868 = vadd.f32 %v762, %v864
        %v869 = vadd.f32 %v763, %v866
        %870 = vrot.lane.b32.xlu0 %v468, 1
        %v871 = vpop.permute.xlu0 %870
        %872 = vrot.lane.b32.xlu0 %v469, 1
        %v873 = vpop.permute.xlu0 %872
        %vm874 = vcmp.lt.s32.totalorder %v477, 1
        %v875 = vsel %vm874, %v871, %v873
        %v876 = vsel %vm874, %v873, %v871
        %s877 = scalar_lea.vmem %s9, 6
        %v878 = vld [vmem:[%s877] sm:$0x3]
        %v880 = vlaneseq
        %v881 = vshrl.u32 %v880, 7
        %v882 = vsub.s32 0, %v881
        %v883 = vrot.slane %v878, %v882
        %v884 = vlaneseq
        %v885 = vshrl.u32 %v884, 7
        %v886 = vsub.s32 1, %v885
        %v887 = vrot.slane %v878, %v886
        %v890 = vmul.f32 %v876, %v883
        %v891 = vmul.f32 %v875, %v887
        %s892 = scalar_lea.vmem %s5, 12
        %v893 = vld [vmem:[%s892] sm:$0xf]
        %v895 = vsel %vm496, %v893, 0
        %v898 = vsel %vm500, %v890, 0
        %v901 = vsel %vm500, %v891, 0
        %903 = vmatprep.subr.mxu0 %v901
        %904 = vmatpush1.msra.mxu0 %v898
        %905 = vmatprep.subr.mxu0 0.0
        %906 = vmatpush1.msra.mxu0 0.0
        %907 = vmatprep.subr.mxu0 0.0
        %908 = vmatpush1.msra.mxu0 0.0
        %909 = vmatprep.subr.mxu0 0.0
        %910 = vmatpush1.msra.mxu0 0.0
        %911 = vmatprep.subr.mxu0 0.0
        %912 = vmatpush1.msra.mxu0 0.0
        %913 = vmatprep.subr.mxu0 0.0
        %914 = vmatpush1.msra.mxu0 0.0
        %915 = vmatprep.subr.mxu0 0.0
        %916 = vmatpush1.msra.mxu0 0.0
        %917 = vmatprep.subr.mxu0 0.0
        %918 = vmatpush1.msra.mxu0 0.0
        %919 = vmatprep.subr.mxu0 0.0
        %920 = vmatpush1.msra.mxu0 0.0
        %921 = vmatprep.subr.mxu0 0.0
        %922 = vmatpush1.msra.mxu0 0.0
        %923 = vmatprep.subr.mxu0 0.0
        %924 = vmatpush1.msra.mxu0 0.0
        %925 = vmatprep.subr.mxu0 0.0
        %926 = vmatpush1.msra.mxu0 0.0
        %927 = vmatprep.subr.mxu0 0.0
        %928 = vmatpush1.msra.mxu0 0.0
        %929 = vmatprep.subr.mxu0 0.0
        %930 = vmatpush1.msra.mxu0 0.0
        %931 = vmatprep.subr.mxu0 0.0
        %932 = vmatpush1.msra.mxu0 0.0
        %933 = vmatprep.subr.mxu0 0.0
        %934 = vmatpush1.msra.mxu0 0.0
        %935 = vmatprep.subr.mxu0 0.0
        %936 = vmatpush1.msra.mxu0 0.0
        %937 = vmatprep.subr.mxu0 0.0
        %938 = vmatpush1.msra.mxu0 0.0
        %939 = vmatprep.subr.mxu0 0.0
        %940 = vmatpush1.msra.mxu0 0.0
        %941 = vmatprep.subr.mxu0 0.0
        %942 = vmatpush1.msra.mxu0 0.0
        %943 = vmatprep.subr.mxu0 0.0
        %944 = vmatpush1.msra.mxu0 0.0
        %945 = vmatprep.subr.mxu0 0.0
        %946 = vmatpush1.msra.mxu0 0.0
        %947 = vmatprep.subr.mxu0 0.0
        %948 = vmatpush1.msra.mxu0 0.0
        %949 = vmatprep.subr.mxu0 0.0
        %950 = vmatpush1.msra.mxu0 0.0
        %951 = vmatprep.subr.mxu0 0.0
        %952 = vmatpush1.msra.mxu0 0.0
        %953 = vmatprep.subr.mxu0 0.0
        %954 = vmatpush1.msra.mxu0 0.0
        %955 = vmatprep.subr.mxu0 0.0
        %956 = vmatpush1.msra.mxu0 0.0
        %957 = vmatprep.subr.mxu0 0.0
        %958 = vmatpush1.msra.mxu0 0.0
        %959 = vmatprep.subr.mxu0 0.0
        %960 = vmatpush1.msra.mxu0 0.0
        %961 = vmatprep.subr.mxu0 0.0
        %962 = vmatpush1.msra.mxu0 0.0
        %963 = vmatprep.subr.mxu0 0.0
        %964 = vmatpush1.msra.mxu0 0.0
        %965 = vmatprep.subr.mxu0 0.0
        %966 = vmatpush1.msra.mxu0 0.0
        %967 = vmatprep.mubr.f32.mxu0 0.0
        %968 = vmatmul.mubr.f32.gmra.mrb[0].mxu0 %v895
        %v969 = vpop.f32.mrb[0].mxu0
        %v970 = vadd.f32 0.0, %v969
        %v971 = vpop.f32.mrb[0].mxu0
        %v972 = vadd.f32 0.0, %v971
        %973 = vdwg.mxu0
        %v974 = vadd.f32 %v868, %v970
        %v975 = vadd.f32 %v869, %v972
        %976 = vrot.lane.b32.xlu0 %v468, 127
        %v977 = vpop.permute.xlu0 %976
        %978 = vrot.lane.b32.xlu0 %v469, 127
        %v979 = vpop.permute.xlu0 %978
        %vm980 = vcmp.lt.s32.totalorder %v477, 127
        %v981 = vsel %vm980, %v977, %v979
        %v982 = vsel %vm980, %v979, %v977
        %s983 = scalar_lea.vmem %s9, 10
        %v984 = vld [vmem:[%s983] sm:$0x3]
        %v986 = vlaneseq
        %v987 = vshrl.u32 %v986, 7
        %v988 = vsub.s32 0, %v987
        %v989 = vrot.slane %v984, %v988
        %v990 = vlaneseq
        %v991 = vshrl.u32 %v990, 7
        %v992 = vsub.s32 1, %v991
        %v993 = vrot.slane %v984, %v992
        %v996 = vmul.f32 %v981, %v989
        %v997 = vmul.f32 %v982, %v993
        %s998 = scalar_lea.vmem %s5, 20
        %v999 = vld [vmem:[%s998] sm:$0xf]
        %v1001 = vsel %vm496, %v999, 0
        %v1004 = vsel %vm500, %v996, 0
        %v1007 = vsel %vm500, %v997, 0
        %1009 = vmatprep.subr.mxu0 %v1007
        %1010 = vmatpush1.msra.mxu0 %v1004
        %1011 = vmatprep.subr.mxu0 0.0
        %1012 = vmatpush1.msra.mxu0 0.0
        %1013 = vmatprep.subr.mxu0 0.0
        %1014 = vmatpush1.msra.mxu0 0.0
        %1015 = vmatprep.subr.mxu0 0.0
        %1016 = vmatpush1.msra.mxu0 0.0
        %1017 = vmatprep.subr.mxu0 0.0
        %1018 = vmatpush1.msra.mxu0 0.0
        %1019 = vmatprep.subr.mxu0 0.0
        %1020 = vmatpush1.msra.mxu0 0.0
        %1021 = vmatprep.subr.mxu0 0.0
        %1022 = vmatpush1.msra.mxu0 0.0
        %1023 = vmatprep.subr.mxu0 0.0
        %1024 = vmatpush1.msra.mxu0 0.0
        %1025 = vmatprep.subr.mxu0 0.0
        %1026 = vmatpush1.msra.mxu0 0.0
        %1027 = vmatprep.subr.mxu0 0.0
        %1028 = vmatpush1.msra.mxu0 0.0
        %1029 = vmatprep.subr.mxu0 0.0
        %1030 = vmatpush1.msra.mxu0 0.0
        %1031 = vmatprep.subr.mxu0 0.0
        %1032 = vmatpush1.msra.mxu0 0.0
        %1033 = vmatprep.subr.mxu0 0.0
        %1034 = vmatpush1.msra.mxu0 0.0
        %1035 = vmatprep.subr.mxu0 0.0
        %1036 = vmatpush1.msra.mxu0 0.0
        %1037 = vmatprep.subr.mxu0 0.0
        %1038 = vmatpush1.msra.mxu0 0.0
        %1039 = vmatprep.subr.mxu0 0.0
        %1040 = vmatpush1.msra.mxu0 0.0
        %1041 = vmatprep.subr.mxu0 0.0
        %1042 = vmatpush1.msra.mxu0 0.0
        %1043 = vmatprep.subr.mxu0 0.0
        %1044 = vmatpush1.msra.mxu0 0.0
        %1045 = vmatprep.subr.mxu0 0.0
        %1046 = vmatpush1.msra.mxu0 0.0
        %1047 = vmatprep.subr.mxu0 0.0
        %1048 = vmatpush1.msra.mxu0 0.0
        %1049 = vmatprep.subr.mxu0 0.0
        %1050 = vmatpush1.msra.mxu0 0.0
        %1051 = vmatprep.subr.mxu0 0.0
        %1052 = vmatpush1.msra.mxu0 0.0
        %1053 = vmatprep.subr.mxu0 0.0
        %1054 = vmatpush1.msra.mxu0 0.0
        %1055 = vmatprep.subr.mxu0 0.0
        %1056 = vmatpush1.msra.mxu0 0.0
        %1057 = vmatprep.subr.mxu0 0.0
        %1058 = vmatpush1.msra.mxu0 0.0
        %1059 = vmatprep.subr.mxu0 0.0
        %1060 = vmatpush1.msra.mxu0 0.0
        %1061 = vmatprep.subr.mxu0 0.0
        %1062 = vmatpush1.msra.mxu0 0.0
        %1063 = vmatprep.subr.mxu0 0.0
        %1064 = vmatpush1.msra.mxu0 0.0
        %1065 = vmatprep.subr.mxu0 0.0
        %1066 = vmatpush1.msra.mxu0 0.0
        %1067 = vmatprep.subr.mxu0 0.0
        %1068 = vmatpush1.msra.mxu0 0.0
        %1069 = vmatprep.subr.mxu0 0.0
        %1070 = vmatpush1.msra.mxu0 0.0
        %1071 = vmatprep.subr.mxu0 0.0
        %1072 = vmatpush1.msra.mxu0 0.0
        %1073 = vmatprep.mubr.f32.mxu0 0.0
        %1074 = vmatmul.mubr.f32.gmra.mrb[0].mxu0 %v1001
        %v1075 = vpop.f32.mrb[0].mxu0
        %v1076 = vadd.f32 0.0, %v1075
        %v1077 = vpop.f32.mrb[0].mxu0
        %v1078 = vadd.f32 0.0, %v1077
        %1079 = vdwg.mxu0
        %v1080 = vadd.f32 %v974, %v1076
        %v1081 = vadd.f32 %v975, %v1078
        %1082 = vrot.lane.b32.xlu0 %v468, 113
        %v1083 = vpop.permute.xlu0 %1082
        %1084 = vrot.lane.b32.xlu0 %v469, 113
        %v1085 = vpop.permute.xlu0 %1084
        %vm1086 = vcmp.lt.s32.totalorder %v477, 113
        %v1087 = vsel %vm1086, %v1083, %v1085
        %v1088 = vsel %vm1086, %v1085, %v1083
        %s1089 = scalar_lea.vmem %s9, 12
        %v1090 = vld [vmem:[%s1089] sm:$0x3]
        %v1092 = vlaneseq
        %v1093 = vshrl.u32 %v1092, 7
        %v1094 = vsub.s32 0, %v1093
        %v1095 = vrot.slane %v1090, %v1094
        %v1096 = vlaneseq
        %v1097 = vshrl.u32 %v1096, 7
        %v1098 = vsub.s32 1, %v1097
        %v1099 = vrot.slane %v1090, %v1098
        %v1102 = vmul.f32 %v1087, %v1095
        %v1103 = vmul.f32 %v1088, %v1099
        %s1104 = scalar_lea.vmem %s5, 24
        %v1105 = vld [vmem:[%s1104] sm:$0xf]
        %v1107 = vsel %vm496, %v1105, 0
        %v1110 = vsel %vm500, %v1102, 0
        %v1113 = vsel %vm500, %v1103, 0
        %1115 = vmatprep.subr.mxu0 %v1113
        %1116 = vmatpush1.msra.mxu0 %v1110
        %1117 = vmatprep.subr.mxu0 0.0
        %1118 = vmatpush1.msra.mxu0 0.0
        %1119 = vmatprep.subr.mxu0 0.0
        %1120 = vmatpush1.msra.mxu0 0.0
        %1121 = vmatprep.subr.mxu0 0.0
        %1122 = vmatpush1.msra.mxu0 0.0
        %1123 = vmatprep.subr.mxu0 0.0
        %1124 = vmatpush1.msra.mxu0 0.0
        %1125 = vmatprep.subr.mxu0 0.0
        %1126 = vmatpush1.msra.mxu0 0.0
        %1127 = vmatprep.subr.mxu0 0.0
        %1128 = vmatpush1.msra.mxu0 0.0
        %1129 = vmatprep.subr.mxu0 0.0
        %1130 = vmatpush1.msra.mxu0 0.0
        %1131 = vmatprep.subr.mxu0 0.0
        %1132 = vmatpush1.msra.mxu0 0.0
        %1133 = vmatprep.subr.mxu0 0.0
        %1134 = vmatpush1.msra.mxu0 0.0
        %1135 = vmatprep.subr.mxu0 0.0
        %1136 = vmatpush1.msra.mxu0 0.0
        %1137 = vmatprep.subr.mxu0 0.0
        %1138 = vmatpush1.msra.mxu0 0.0
        %1139 = vmatprep.subr.mxu0 0.0
        %1140 = vmatpush1.msra.mxu0 0.0
        %1141 = vmatprep.subr.mxu0 0.0
        %1142 = vmatpush1.msra.mxu0 0.0
        %1143 = vmatprep.subr.mxu0 0.0
        %1144 = vmatpush1.msra.mxu0 0.0
        %1145 = vmatprep.subr.mxu0 0.0
        %1146 = vmatpush1.msra.mxu0 0.0
        %1147 = vmatprep.subr.mxu0 0.0
        %1148 = vmatpush1.msra.mxu0 0.0
        %1149 = vmatprep.subr.mxu0 0.0
        %1150 = vmatpush1.msra.mxu0 0.0
        %1151 = vmatprep.subr.mxu0 0.0
        %1152 = vmatpush1.msra.mxu0 0.0
        %1153 = vmatprep.subr.mxu0 0.0
        %1154 = vmatpush1.msra.mxu0 0.0
        %1155 = vmatprep.subr.mxu0 0.0
        %1156 = vmatpush1.msra.mxu0 0.0
        %1157 = vmatprep.subr.mxu0 0.0
        %1158 = vmatpush1.msra.mxu0 0.0
        %1159 = vmatprep.subr.mxu0 0.0
        %1160 = vmatpush1.msra.mxu0 0.0
        %1161 = vmatprep.subr.mxu0 0.0
        %1162 = vmatpush1.msra.mxu0 0.0
        %1163 = vmatprep.subr.mxu0 0.0
        %1164 = vmatpush1.msra.mxu0 0.0
        %1165 = vmatprep.subr.mxu0 0.0
        %1166 = vmatpush1.msra.mxu0 0.0
        %1167 = vmatprep.subr.mxu0 0.0
        %1168 = vmatpush1.msra.mxu0 0.0
        %1169 = vmatprep.subr.mxu0 0.0
        %1170 = vmatpush1.msra.mxu0 0.0
        %1171 = vmatprep.subr.mxu0 0.0
        %1172 = vmatpush1.msra.mxu0 0.0
        %1173 = vmatprep.subr.mxu0 0.0
        %1174 = vmatpush1.msra.mxu0 0.0
        %1175 = vmatprep.subr.mxu0 0.0
        %1176 = vmatpush1.msra.mxu0 0.0
        %1177 = vmatprep.subr.mxu0 0.0
        %1178 = vmatpush1.msra.mxu0 0.0
        %1179 = vmatprep.mubr.f32.mxu0 0.0
        %1180 = vmatmul.mubr.f32.gmra.mrb[0].mxu0 %v1107
        %v1181 = vpop.f32.mrb[0].mxu0
        %v1182 = vadd.f32 0.0, %v1181
        %v1183 = vpop.f32.mrb[0].mxu0
        %v1184 = vadd.f32 0.0, %v1183
        %1185 = vdwg.mxu0
        %v1186 = vadd.f32 %v1080, %v1182
        %v1187 = vadd.f32 %v1081, %v1184
        %1188 = vrot.lane.b32.xlu0 %v468, 112
        %v1189 = vpop.permute.xlu0 %1188
        %1190 = vrot.lane.b32.xlu0 %v469, 112
        %v1191 = vpop.permute.xlu0 %1190
        %vm1192 = vcmp.lt.s32.totalorder %v477, 112
        %v1193 = vsel %vm1192, %v1189, %v1191
        %v1194 = vsel %vm1192, %v1191, %v1189
        %s1195 = scalar_lea.vmem %s9, 14
        %v1196 = vld [vmem:[%s1195] sm:$0x3]
        %v1198 = vlaneseq
        %v1199 = vshrl.u32 %v1198, 7
        %v1200 = vsub.s32 0, %v1199
        %v1201 = vrot.slane %v1196, %v1200
        %v1202 = vlaneseq
        %v1203 = vshrl.u32 %v1202, 7
        %v1204 = vsub.s32 1, %v1203
        %v1205 = vrot.slane %v1196, %v1204
        %v1208 = vmul.f32 %v1193, %v1201
        %v1209 = vmul.f32 %v1194, %v1205
        %s1210 = scalar_lea.vmem %s5, 28
        %v1211 = vld [vmem:[%s1210] sm:$0xf]
        %v1213 = vsel %vm496, %v1211, 0
        %v1216 = vsel %vm500, %v1208, 0
        %v1219 = vsel %vm500, %v1209, 0
        %1221 = vmatprep.subr.mxu0 %v1219
        %1222 = vmatpush1.msra.mxu0 %v1216
        %1223 = vmatprep.subr.mxu0 0.0
        %1224 = vmatpush1.msra.mxu0 0.0
        %1225 = vmatprep.subr.mxu0 0.0
        %1226 = vmatpush1.msra.mxu0 0.0
        %1227 = vmatprep.subr.mxu0 0.0
        %1228 = vmatpush1.msra.mxu0 0.0
        %1229 = vmatprep.subr.mxu0 0.0
        %1230 = vmatpush1.msra.mxu0 0.0
        %1231 = vmatprep.subr.mxu0 0.0
        %1232 = vmatpush1.msra.mxu0 0.0
        %1233 = vmatprep.subr.mxu0 0.0
        %1234 = vmatpush1.msra.mxu0 0.0
        %1235 = vmatprep.subr.mxu0 0.0
        %1236 = vmatpush1.msra.mxu0 0.0
        %1237 = vmatprep.subr.mxu0 0.0
        %1238 = vmatpush1.msra.mxu0 0.0
        %1239 = vmatprep.subr.mxu0 0.0
        %1240 = vmatpush1.msra.mxu0 0.0
        %1241 = vmatprep.subr.mxu0 0.0
        %1242 = vmatpush1.msra.mxu0 0.0
        %1243 = vmatprep.subr.mxu0 0.0
        %1244 = vmatpush1.msra.mxu0 0.0
        %1245 = vmatprep.subr.mxu0 0.0
        %1246 = vmatpush1.msra.mxu0 0.0
        %1247 = vmatprep.subr.mxu0 0.0
        %1248 = vmatpush1.msra.mxu0 0.0
        %1249 = vmatprep.subr.mxu0 0.0
        %1250 = vmatpush1.msra.mxu0 0.0
        %1251 = vmatprep.subr.mxu0 0.0
        %1252 = vmatpush1.msra.mxu0 0.0
        %1253 = vmatprep.subr.mxu0 0.0
        %1254 = vmatpush1.msra.mxu0 0.0
        %1255 = vmatprep.subr.mxu0 0.0
        %1256 = vmatpush1.msra.mxu0 0.0
        %1257 = vmatprep.subr.mxu0 0.0
        %1258 = vmatpush1.msra.mxu0 0.0
        %1259 = vmatprep.subr.mxu0 0.0
        %1260 = vmatpush1.msra.mxu0 0.0
        %1261 = vmatprep.subr.mxu0 0.0
        %1262 = vmatpush1.msra.mxu0 0.0
        %1263 = vmatprep.subr.mxu0 0.0
        %1264 = vmatpush1.msra.mxu0 0.0
        %1265 = vmatprep.subr.mxu0 0.0
        %1266 = vmatpush1.msra.mxu0 0.0
        %1267 = vmatprep.subr.mxu0 0.0
        %1268 = vmatpush1.msra.mxu0 0.0
        %1269 = vmatprep.subr.mxu0 0.0
        %1270 = vmatpush1.msra.mxu0 0.0
        %1271 = vmatprep.subr.mxu0 0.0
        %1272 = vmatpush1.msra.mxu0 0.0
        %1273 = vmatprep.subr.mxu0 0.0
        %1274 = vmatpush1.msra.mxu0 0.0
        %1275 = vmatprep.subr.mxu0 0.0
        %1276 = vmatpush1.msra.mxu0 0.0
        %1277 = vmatprep.subr.mxu0 0.0
        %1278 = vmatpush1.msra.mxu0 0.0
        %1279 = vmatprep.subr.mxu0 0.0
        %1280 = vmatpush1.msra.mxu0 0.0
        %1281 = vmatprep.subr.mxu0 0.0
        %1282 = vmatpush1.msra.mxu0 0.0
        %1283 = vmatprep.subr.mxu0 0.0
        %1284 = vmatpush1.msra.mxu0 0.0
        %1285 = vmatprep.mubr.f32.mxu0 0.0
        %1286 = vmatmul.mubr.f32.gmra.mrb[0].mxu0 %v1213
        %v1287 = vpop.f32.mrb[0].mxu0
        %v1288 = vadd.f32 0.0, %v1287
        %v1289 = vpop.f32.mrb[0].mxu0
        %v1290 = vadd.f32 0.0, %v1289
        %1291 = vdwg.mxu0
        %v1292 = vadd.f32 %v1186, %v1288
        %v1293 = vadd.f32 %v1187, %v1290
        %1294 = vrot.lane.b32.xlu0 %v468, 111
        %v1295 = vpop.permute.xlu0 %1294
        %1296 = vrot.lane.b32.xlu0 %v469, 111
        %v1297 = vpop.permute.xlu0 %1296
        %vm1298 = vcmp.lt.s32.totalorder %v477, 111
        %v1299 = vsel %vm1298, %v1295, %v1297
        %v1300 = vsel %vm1298, %v1297, %v1295
        %s1301 = scalar_lea.vmem %s9, 16
        %v1302 = vld [vmem:[%s1301] sm:$0x3]
        %v1304 = vlaneseq
        %v1305 = vshrl.u32 %v1304, 7
        %v1306 = vsub.s32 0, %v1305
        %v1307 = vrot.slane %v1302, %v1306
        %v1308 = vlaneseq
        %v1309 = vshrl.u32 %v1308, 7
        %v1310 = vsub.s32 1, %v1309
        %v1311 = vrot.slane %v1302, %v1310
        %v1314 = vmul.f32 %v1299, %v1307
        %v1315 = vmul.f32 %v1300, %v1311
        %s1316 = scalar_lea.vmem %s5, 32
        %v1317 = vld [vmem:[%s1316] sm:$0xf]
        %v1319 = vsel %vm496, %v1317, 0
        %v1322 = vsel %vm500, %v1314, 0
        %v1325 = vsel %vm500, %v1315, 0
        %1327 = vmatprep.subr.mxu0 %v1325
        %1328 = vmatpush1.msra.mxu0 %v1322
        %1329 = vmatprep.subr.mxu0 0.0
        %1330 = vmatpush1.msra.mxu0 0.0
        %1331 = vmatprep.subr.mxu0 0.0
        %1332 = vmatpush1.msra.mxu0 0.0
        %1333 = vmatprep.subr.mxu0 0.0
        %1334 = vmatpush1.msra.mxu0 0.0
        %1335 = vmatprep.subr.mxu0 0.0
        %1336 = vmatpush1.msra.mxu0 0.0
        %1337 = vmatprep.subr.mxu0 0.0
        %1338 = vmatpush1.msra.mxu0 0.0
        %1339 = vmatprep.subr.mxu0 0.0
        %1340 = vmatpush1.msra.mxu0 0.0
        %1341 = vmatprep.subr.mxu0 0.0
        %1342 = vmatpush1.msra.mxu0 0.0
        %1343 = vmatprep.subr.mxu0 0.0
        %1344 = vmatpush1.msra.mxu0 0.0
        %1345 = vmatprep.subr.mxu0 0.0
        %1346 = vmatpush1.msra.mxu0 0.0
        %1347 = vmatprep.subr.mxu0 0.0
        %1348 = vmatpush1.msra.mxu0 0.0
        %1349 = vmatprep.subr.mxu0 0.0
        %1350 = vmatpush1.msra.mxu0 0.0
        %1351 = vmatprep.subr.mxu0 0.0
        %1352 = vmatpush1.msra.mxu0 0.0
        %1353 = vmatprep.subr.mxu0 0.0
        %1354 = vmatpush1.msra.mxu0 0.0
        %1355 = vmatprep.subr.mxu0 0.0
        %1356 = vmatpush1.msra.mxu0 0.0
        %1357 = vmatprep.subr.mxu0 0.0
        %1358 = vmatpush1.msra.mxu0 0.0
        %1359 = vmatprep.subr.mxu0 0.0
        %1360 = vmatpush1.msra.mxu0 0.0
        %1361 = vmatprep.subr.mxu0 0.0
        %1362 = vmatpush1.msra.mxu0 0.0
        %1363 = vmatprep.subr.mxu0 0.0
        %1364 = vmatpush1.msra.mxu0 0.0
        %1365 = vmatprep.subr.mxu0 0.0
        %1366 = vmatpush1.msra.mxu0 0.0
        %1367 = vmatprep.subr.mxu0 0.0
        %1368 = vmatpush1.msra.mxu0 0.0
        %1369 = vmatprep.subr.mxu0 0.0
        %1370 = vmatpush1.msra.mxu0 0.0
        %1371 = vmatprep.subr.mxu0 0.0
        %1372 = vmatpush1.msra.mxu0 0.0
        %1373 = vmatprep.subr.mxu0 0.0
        %1374 = vmatpush1.msra.mxu0 0.0
        %1375 = vmatprep.subr.mxu0 0.0
        %1376 = vmatpush1.msra.mxu0 0.0
        %1377 = vmatprep.subr.mxu0 0.0
        %1378 = vmatpush1.msra.mxu0 0.0
        %1379 = vmatprep.subr.mxu0 0.0
        %1380 = vmatpush1.msra.mxu0 0.0
        %1381 = vmatprep.subr.mxu0 0.0
        %1382 = vmatpush1.msra.mxu0 0.0
        %1383 = vmatprep.subr.mxu0 0.0
        %1384 = vmatpush1.msra.mxu0 0.0
        %1385 = vmatprep.subr.mxu0 0.0
        %1386 = vmatpush1.msra.mxu0 0.0
        %1387 = vmatprep.subr.mxu0 0.0
        %1388 = vmatpush1.msra.mxu0 0.0
        %1389 = vmatprep.subr.mxu0 0.0
        %1390 = vmatpush1.msra.mxu0 0.0
        %1391 = vmatprep.mubr.f32.mxu0 0.0
        %1392 = vmatmul.mubr.f32.gmra.mrb[0].mxu0 %v1319
        %v1393 = vpop.f32.mrb[0].mxu0
        %v1394 = vadd.f32 0.0, %v1393
        %v1395 = vpop.f32.mrb[0].mxu0
        %v1396 = vadd.f32 0.0, %v1395
        %1397 = vdwg.mxu0
        %v1398 = vadd.f32 %v1292, %v1394
        %v1399 = vadd.f32 %v1293, %v1396
        %v1400 = vld [vmem:[%s6] sm:$0xf]
        %1402 = vset.pattern.permute.xlu0 0
        %1403 = vperm.xlu0 %1402, %v1400
        %v1404 = vpop.permute.xlu0 %1403
        %v1406 = vmul.f32 %v1398, %v1404
        %v1407 = vmul.f32 %v1399, %v1404
        %v1408 = vld [vmem:[%s7] sm:$0xf]
        %1410 = vset.pattern.permute.xlu0 0
        %1411 = vperm.xlu0 %1410, %v1408
        %v1412 = vpop.permute.xlu0 %1411
        %v1414 = vadd.f32 %v1406, %v1412
        %v1415 = vadd.f32 %v1407, %v1412
        %v1416 = vmax.f32 %v1414, 0.0
        %v1417 = vmax.f32 %v1415, 0.0
        %v1418 = vld [vmem:[%s8] sm:$0xff]
        %v1419 = vld [vmem:[%s8 + $0x8] sm:$0xff]
        %v1421 = vsel %vm496, %v1418, 0
        %v1424 = vsel %vm496, %v1419, 0
        %v1427 = vsel %vm500, %v1416, 0
        %v1430 = vsel %vm500, %v1417, 0
        %1432 = vmatprep.subr.mxu0 %v1430
        %1433 = vmatpush1.msra.mxu0 %v1427
        %1434 = vmatprep.subr.mxu0 0.0
        %1435 = vmatpush1.msra.mxu0 0.0
        %1436 = vmatprep.subr.mxu0 0.0
        %1437 = vmatpush1.msra.mxu0 0.0
        %1438 = vmatprep.subr.mxu0 0.0
        %1439 = vmatpush1.msra.mxu0 0.0
        %1440 = vmatprep.subr.mxu0 0.0
        %1441 = vmatpush1.msra.mxu0 0.0
        %1442 = vmatprep.subr.mxu0 0.0
        %1443 = vmatpush1.msra.mxu0 0.0
        %1444 = vmatprep.subr.mxu0 0.0
        %1445 = vmatpush1.msra.mxu0 0.0
        %1446 = vmatprep.subr.mxu0 0.0
        %1447 = vmatpush1.msra.mxu0 0.0
        %1448 = vmatprep.subr.mxu0 0.0
        %1449 = vmatpush1.msra.mxu0 0.0
        %1450 = vmatprep.subr.mxu0 0.0
        %1451 = vmatpush1.msra.mxu0 0.0
        %1452 = vmatprep.subr.mxu0 0.0
        %1453 = vmatpush1.msra.mxu0 0.0
        %1454 = vmatprep.subr.mxu0 0.0
        %1455 = vmatpush1.msra.mxu0 0.0
        %1456 = vmatprep.subr.mxu0 0.0
        %1457 = vmatpush1.msra.mxu0 0.0
        %1458 = vmatprep.subr.mxu0 0.0
        %1459 = vmatpush1.msra.mxu0 0.0
        %1460 = vmatprep.subr.mxu0 0.0
        %1461 = vmatpush1.msra.mxu0 0.0
        %1462 = vmatprep.subr.mxu0 0.0
        %1463 = vmatpush1.msra.mxu0 0.0
        %1464 = vmatprep.subr.mxu0 0.0
        %1465 = vmatpush1.msra.mxu0 0.0
        %1466 = vmatprep.subr.mxu0 0.0
        %1467 = vmatpush1.msra.mxu0 0.0
        %1468 = vmatprep.subr.mxu0 0.0
        %1469 = vmatpush1.msra.mxu0 0.0
        %1470 = vmatprep.subr.mxu0 0.0
        %1471 = vmatpush1.msra.mxu0 0.0
        %1472 = vmatprep.subr.mxu0 0.0
        %1473 = vmatpush1.msra.mxu0 0.0
        %1474 = vmatprep.subr.mxu0 0.0
        %1475 = vmatpush1.msra.mxu0 0.0
        %1476 = vmatprep.subr.mxu0 0.0
        %1477 = vmatpush1.msra.mxu0 0.0
        %1478 = vmatprep.subr.mxu0 0.0
        %1479 = vmatpush1.msra.mxu0 0.0
        %1480 = vmatprep.subr.mxu0 0.0
        %1481 = vmatpush1.msra.mxu0 0.0
        %1482 = vmatprep.subr.mxu0 0.0
        %1483 = vmatpush1.msra.mxu0 0.0
        %1484 = vmatprep.subr.mxu0 0.0
        %1485 = vmatpush1.msra.mxu0 0.0
        %1486 = vmatprep.subr.mxu0 0.0
        %1487 = vmatpush1.msra.mxu0 0.0
        %1488 = vmatprep.subr.mxu0 0.0
        %1489 = vmatpush1.msra.mxu0 0.0
        %1490 = vmatprep.subr.mxu0 0.0
        %1491 = vmatpush1.msra.mxu0 0.0
        %1492 = vmatprep.subr.mxu0 0.0
        %1493 = vmatpush1.msra.mxu0 0.0
        %1494 = vmatprep.subr.mxu0 0.0
        %1495 = vmatpush1.msra.mxu0 0.0
        %1496 = vmatprep.mubr.f32.mxu0 0.0
        %1497 = vmatmul.mubr.f32.gmra.mrb[0].mxu0 %v1421
        %v1498 = vpop.f32.mrb[0].mxu0
        %v1499 = vadd.f32 0.0, %v1498
        %v1500 = vpop.f32.mrb[0].mxu0
        %v1501 = vadd.f32 0.0, %v1500
        %1502 = vmatprep.mubr.f32.mxu0 0.0
        %1503 = vmatmul.mubr.f32.gmra.mrb[0].mxu0 %v1424
        %v1504 = vpop.f32.mrb[0].mxu0
        %v1505 = vadd.f32 0.0, %v1504
        %v1506 = vpop.f32.mrb[0].mxu0
        %v1507 = vadd.f32 0.0, %v1506
        %1508 = vdwg.mxu0
        %v1509 = vadd.f32 %v372, %v1499
        %v1510 = vadd.f32 %v373, %v1501
        %v1511 = vadd.f32 %v374, %v1505
        %v1512 = vadd.f32 %v375, %v1507
        %s1513 = sld [smem:[#allocation2]]
        %vm1514 = vcmp.ge.f32.partialorder %v1509, 0.0
        %vm1515 = vcmp.ge.f32.partialorder %v1510, 0.0
        %vm1516 = vcmp.ge.f32.partialorder %v1511, 0.0
        %vm1517 = vcmp.ge.f32.partialorder %v1512, 0.0
        %v1518 = vstv %s1513
        %v1519 = vmul.f32 %v1518, %v1509
        %v1520 = vmul.f32 %v1518, %v1510
        %v1521 = vmul.f32 %v1518, %v1511
        %v1522 = vmul.f32 %v1518, %v1512
        %v1523 = vsel %vm1514, %v1509, %v1519
        %v1524 = vsel %vm1515, %v1510, %v1520
        %v1525 = vsel %vm1516, %v1511, %v1521
        %v1526 = vsel %vm1517, %v1512, %v1522
        %1527 = vst [vmem:[%s366] sm:$0xff] %v1523
        %1528 = vst [vmem:[%s366 + $0x8] sm:$0xff] %v1524
        %1529 = vst [vmem:[%s366 + $0x10] sm:$0xff] %v1525
        %1530 = vst [vmem:[%s366 + $0x18] sm:$0xff] %v1526
        %s1531 = sand.u32 %s249, 1
        %s1532 = scalar_lea.sflag [#allocation5], %s1531
        %s1533 = sand.u32 %s249, 1
        %s1534 = smul.addr %s1533, 32
        %s1535 = scalar_lea.vmem [#allocation6], %s1534
        // Predicated region
        $region65: #{tpu_custom_call.1} parent=59 // pred_check
          %p1536 = pneg %p259
        $region66: #{tpu_custom_call.1} parent=59 // pred_check_branch
          %1538 = sbr.rel (%p1536) target = $region68
        $region67: #{tpu_custom_call.1} parent=59 // pred_region
          %s1540 = ssub.s32 512, 512
          %1541 = vsyncadd %s1532, %s1540
          %s1542 = smul.addr %s26, 4
          %s1543 = smul.addr %s1542, 128
          %s1544 = scalar_lea.hbm %s10, %s1543
          %s1545 = sshll.u32 %s1535, 4
          %s1546 = int_to_ptr.vmem [resolvable:$true] %s1545
          %1551 = dma.vmem_to_hbm [thread:$0]  %s1546, 512, %s1544, %s1532, 256, 256, 16
        $region68: #{tpu_custom_call.1} parent=59 // pred_fallthru
          _
      $region60: #{tpu_custom_call.1} parent=5 // pred_fallthru
        _
      %p1552 = scmp.le.s32.totalorder 2, %s21
      // Predicated region
      $region69: #{tpu_custom_call.1} parent=5 // pred_check
        %p1553 = pneg %p1552
      $region70: #{tpu_custom_call.1} parent=5 // pred_check_branch
        %1555 = sbr.rel (%p1553) target = $region72
      $region71: #{tpu_custom_call.1} parent=5 // pred_region
        %s1556 = ssub.s32 %s21, 2
        // Predicated region
        $region73: #{tpu_custom_call.1} parent=71 // pred_check
          %p1557 = pneg %p265
        $region74: #{tpu_custom_call.1} parent=71 // pred_check_branch
          %1559 = sbr.rel (%p1557) target = $region76
        $region75: #{tpu_custom_call.1} parent=71 // pred_region
          %s1560 = sand.u32 %s250, 1
          %s1561 = scalar_lea.sflag [#allocation5], %s1560
          %s1562 = sand.u32 %s250, 1
          %s1563 = smul.addr %s1562, 32
          %s1564 = scalar_lea.vmem [#allocation6], %s1563
          %1565 = dma.done %s1561, 512
        $region76: #{tpu_custom_call.1} parent=71 // pred_fallthru
          _
      $region72: #{tpu_custom_call.1} parent=5 // pred_fallthru
        _
    $region6: #{tpu_custom_call.1} parent=1 // loop_footer
      %s25 = sadd.s32 1, %s21
    $region7: #{tpu_custom_call.1} parent=1 // loop_footer_branch
      %20 = sbr.rel target = $region3
    $region8: #{tpu_custom_call.1} parent=1 // loop_exit
      _
    %1566 = vsyncpa [#allocation4], 1
    %s1567 = scalar_lea.sflag [#allocation4], 1
    %1568 = vsyncpa %s1567, 1
    %1569 = vsyncpa [#allocation5], 1
    %s1570 = scalar_lea.sflag [#allocation5], 1
    %1571 = vsyncpa %s1570, 1

</llo_original>
